<compile_context>
chip_gen: v7x
topology: tpu7x:2x2x1
jax: 0.10.0
libtpu: 0.0.40
codegen_flags: <defaults>
</compile_context>

<pallas_src>
import functools

import jax
import jax.numpy as jnp
from jax.experimental import pallas as pl
from jax.experimental.pallas import tpu as pltpu

_NEG_BIG = -1e30  # finite "-inf": exp() underflows to 0 without inf-inf NaNs


def _round_up(x, m):
    return (x + m - 1) // m * m


def _vmem_capacity_bytes():
    """Per-core VMEM capacity, with a conservative fallback."""
    try:
        info = pltpu.get_tpu_info()
        cap = getattr(info, "vmem_capacity_bytes", None)
        if cap:
            return int(cap)
    except Exception:
        pass
    return 64 * 1024 * 1024  # v7x-safe fallback


def _const_spec(shape, single_buffer):
    """BlockSpec for a grid-invariant (weight/bias) operand."""
    idx = lambda b, n: (0,) * len(shape)
    if single_buffer:
        try:
            return pl.BlockSpec(shape, idx, pipeline_mode=pl.Buffered(1))
        except (AttributeError, TypeError):
            pass
    return pl.BlockSpec(shape, idx)


def gated_attn_kernel(x_ref, wab_ref, bab_ref, wc_ref, bc_ref, feat_ref,
                      m_sc, l_sc, acc_sc, *, n_valid, tile_n, d_pad,
                      mask_tokens):
    ni = pl.program_id(1)

    @pl.when(ni == 0)
    def _():
        m_sc[...] = jnp.full_like(m_sc, _NEG_BIG)
        l_sc[...] = jnp.zeros_like(l_sc)
        acc_sc[...] = jnp.zeros_like(acc_sc)

    x = x_ref[0]                                            # (TN, L), native dtype

    # Fused gate projections: one matmul for both Wa and Wb.
    hab = jnp.dot(x, wab_ref[...],
                  preferred_element_type=jnp.float32) + bab_ref[...]   # (TN, 2*Dp)
    a = jnp.tanh(hab[:, :d_pad])
    b = jax.nn.sigmoid(hab[:, d_pad:])
    h = a * b                                               # (TN, Dp) f32

    logits = jnp.dot(h, wc_ref[...],
                     preferred_element_type=jnp.float32) + bc_ref[...]  # (TN, Cp)

    # Mask padded token rows so they do not contribute to the softmax.
    # Emitted only when a token remainder exists (static); zero-padded rows in
    # the wrapper keep the contrib matmul free of garbage.
    if mask_tokens:
        row = ni * tile_n + jax.lax.broadcasted_iota(jnp.int32, logits.shape, 0)
        logits = jnp.where(row < n_valid, logits, _NEG_BIG)

    # Online softmax over the token axis.
    m_prev = m_sc[...]                                      # (1, Cp)
    m_new = jnp.maximum(m_prev, jnp.max(logits, axis=0, keepdims=True))
    alpha = jnp.exp(m_prev - m_new)                         # (1, Cp)
    e = jnp.exp(logits - m_new)                             # (TN, Cp)
    l_sc[...] = alpha * l_sc[...] + jnp.sum(e, axis=0, keepdims=True)

    # Unnormalized feature contribution: contract over tokens directly
    # ('nc,nl->cl'), no materialized (N, C) transpose.
    contrib = jax.lax.dot_general(
        e, x, dimension_numbers=(((0,), (0,)), ((), ())),
        preferred_element_type=jnp.float32)                 # (Cp, L)
    acc_sc[...] = jnp.transpose(alpha) * acc_sc[...] + contrib
    m_sc[...] = m_new

    @pl.when(ni == pl.num_programs(1) - 1)
    def _():
        # Normalize once on the small (Cp, L) accumulator.  Exact divide on Cp
        # values (once per batch) keeps the tight test tolerance.
        scale = 1.0 / l_sc[...]                             # (1, Cp)
        feat_ref[0] = (acc_sc[...] * jnp.transpose(scale)).astype(feat_ref.dtype)


def attn_net_gated_forward(x, wa_t, ba, wb_t, bb, wc_t, bc, *, tile_n=None,
                           single_buffer_weights=True):
    """x: (B, N, L); weights pre-transposed to (in, out); returns (B, C, L)."""
    B, N, L = x.shape
    D = wa_t.shape[1]
    C = wc_t.shape[1]

    # Padded sizes: D to a lane-dense multiple of 128 (it is a lane dim and a
    # contraction dim), C only to the sublane multiple (C is tiny).
    Dp = _round_up(D, 128)
    Cp = _round_up(C, 8)

    isz = x.dtype.itemsize
    wisz = wa_t.dtype.itemsize
    sub = max(8, 32 // isz)          # sublane multiple: 8 f32 / 16 bf16 / 32 int8

    # --- VMEM budget (per-chip, queried when possible) ----------------------
    vmem_cap = _vmem_capacity_bytes()
    budget = int(0.8 * vmem_cap)

    n_wbuf = 1 if single_buffer_weights else 2
    fixed = ((L * 2 * Dp + 2 * Dp + Dp * Cp + Cp) * wisz * n_wbuf  # weights/biases
             + 2 * Cp * L * isz                                    # output (dbl buf)
             + (2 * Cp + Cp * L) * 4)                              # scratch

    if tile_n is None:
        # Fill the remaining budget with the double-buffered x tile.
        avail = max(budget - fixed, 2 * sub * L * isz)
        tile_n = max(sub, min(2048, avail // (2 * L * isz)))

    tn = _round_up(min(int(tile_n), _round_up(N, sub)), sub)
    while tn > sub and fixed + 2 * tn * L * isz > budget:
        tn = _round_up(max(sub, tn // 2), sub)

    Np = _round_up(N, tn)
    n_tiles = Np // tn
    mask_tokens = Np != N

    # x is streamed as-is: no L padding, and no HBM copy unless a token
    # remainder exists.  Zero-padding the remainder keeps the contrib matmul
    # free of 0*NaN from out-of-bounds rows; padded rows are also masked.
    xp = x if Np == N else jnp.pad(x, ((0, 0), (0, Np - N), (0, 0)))

    wa_p = jnp.pad(wa_t, ((0, 0), (0, Dp - D)))
    wb_p = jnp.pad(wb_t, ((0, 0), (0, Dp - D)))
    wab = jnp.concatenate([wa_p, wb_p], axis=1)              # (L, 2*Dp)
    bab = jnp.concatenate([jnp.pad(ba, ((0, 0), (0, Dp - D))),
                           jnp.pad(bb, ((0, 0), (0, Dp - D)))], axis=1)
    wc_p = jnp.pad(wc_t, ((0, Dp - D), (0, Cp - C)))
    bc_p = jnp.pad(bc, ((0, 0), (0, Cp - C)))

    est = fixed + 2 * tn * L * isz
    vmem_limit = int(min(budget, max(2 * est, 32 * 1024 * 1024)))
    vmem_limit = int(max(vmem_limit, est + (4 << 20)))

    kernel = functools.partial(gated_attn_kernel, n_valid=N, tile_n=tn,
                               d_pad=Dp, mask_tokens=mask_tokens)

    def _run(single_buffer):
        in_specs = [
            pl.BlockSpec((1, tn, L), lambda b, n: (b, n, 0)),   # x tile (streamed)
            _const_spec((L, 2 * Dp), single_buffer),            # [Wa|Wb]^T
            _const_spec((1, 2 * Dp), single_buffer),            # [ba|bb]
            _const_spec((Dp, Cp), single_buffer),               # Wc^T
            _const_spec((1, Cp), single_buffer),                # bc
        ]
        return pl.pallas_call(
            kernel,
            out_shape=jax.ShapeDtypeStruct((B, Cp, L), x.dtype),
            grid_spec=pltpu.PrefetchScalarGridSpec(
                num_scalar_prefetch=0,
                grid=(B, n_tiles),
                in_specs=in_specs,
                out_specs=pl.BlockSpec((1, Cp, L), lambda b, n: (b, 0, 0)),
                scratch_shapes=[
                    pltpu.VMEM((1, Cp), jnp.float32),    # running max
                    pltpu.VMEM((1, Cp), jnp.float32),    # running sum
                    pltpu.VMEM((Cp, L), jnp.float32),    # feat accumulator
                ],
            ),
            compiler_params=pltpu.CompilerParams(
                dimension_semantics=("parallel", "arbitrary"),
                vmem_limit_bytes=vmem_limit),
        )(xp, wab, bab, wc_p, bc_p)

    try:
        feat_p = jax.block_until_ready(_run(single_buffer_weights))
    except Exception:
        if not single_buffer_weights:
            raise
        # Fall back to default (double-buffered) weight blocks.
        feat_p = _run(False)

    return feat_p[:, :C, :]


def reference_forward(x, wa_t, ba, wb_t, bb, wc_t, bc):
    xf = x.astype(jnp.float32)
    a = jnp.tanh(xf @ wa_t + ba)
    b = jax.nn.sigmoid(xf @ wb_t + bb)
    A = (a * b) @ wc_t + bc                      # (B, N, C)
    A = jnp.swapaxes(A, 1, 2)                    # (B, C, N)
    A = jax.nn.softmax(A, axis=2)
    return (A @ xf).astype(x.dtype)              # (B, C, L)


def init_linear(key, fan_in, fan_out, dtype=jnp.float32):
    # PyTorch-style uniform(-1/sqrt(fan_in), 1/sqrt(fan_in)); deterministic.
    kw, kb = jax.random.split(key)
    bound = 1.0 / (fan_in ** 0.5)
    w_t = jax.random.uniform(kw, (fan_in, fan_out), dtype, -bound, bound)
    b = jax.random.uniform(kb, (1, fan_out), dtype, -bound, bound)
    return w_t, b


if __name__ == "__main__":
    # Small shapes consistent with the module (x: (B, N, L); L=in_dim,
    # D=hidden, C=n_classes).  N deliberately not a multiple of 8 to exercise
    # the token-padding mask.
    B, N, L, D, C = 2, 45, 32, 16, 12

    key = jax.random.PRNGKey(0)
    kx, ka, kb, kc, kx2 = jax.random.split(key, 5)

    x = jax.random.normal(kx, (B, N, L), jnp.float32)
    wa_t, ba = init_linear(ka, L, D)    # attention_a Linear(L, D)
    wb_t, bb = init_linear(kb, L, D)    # attention_b Linear(L, D)
    wc_t, bc = init_linear(kc, D, C)    # attention_c Linear(D, C)

    ref = reference_forward(x, wa_t, ba, wb_t, bb, wc_t, bc)

    # Multi-tile path: online (flash-style) softmax across 3 tiles + token pad.
    feat = attn_net_gated_forward(x, wa_t, ba, wb_t, bb, wc_t, bc, tile_n=16)
    feat = jax.block_until_ready(feat)
    assert feat.shape == (B, C, L)
    assert jnp.allclose(feat, ref, atol=3e-5, rtol=3e-5)

    # Default (auto tile, single-tile) path.
    feat1 = attn_net_gated_forward(x, wa_t, ba, wb_t, bb, wc_t, bc)
    feat1 = jax.block_until_ready(feat1)
    assert jnp.allclose(feat1, ref, atol=3e-5, rtol=3e-5)

    # No-remainder path: N % tile_n == 0, so no mask emission and no x pad/copy.
    N2 = 64
    x2 = jax.random.normal(kx2, (B, N2, L), jnp.float32)
    ref2 = reference_forward(x2, wa_t, ba, wb_t, bb, wc_t, bc)
    feat2 = attn_net_gated_forward(x2, wa_t, ba, wb_t, bb, wc_t, bc, tile_n=32)
    feat2 = jax.block_until_ready(feat2)
    assert jnp.allclose(feat2, ref2, atol=3e-5, rtol=3e-5)

    print("KERNEL_OK")
</pallas_src>

<mosaic_0001>
module attributes {stable_mosaic.version = 11 : i64} {
  func.func @gated_attn_kernel(%arg0: i32, %arg1: i32, %arg2: memref<1x16x32xf32, #tpu.memory_space<vmem>>, %arg3: memref<32x256xf32, #tpu.memory_space<vmem>>, %arg4: memref<1x256xf32, #tpu.memory_space<vmem>>, %arg5: memref<128x16xf32, #tpu.memory_space<vmem>>, %arg6: memref<1x16xf32, #tpu.memory_space<vmem>>, %arg7: memref<1x16x32xf32, #tpu.memory_space<vmem>>, %arg8: memref<1x16xf32, #tpu.memory_space<vmem>>, %arg9: memref<1x16xf32, #tpu.memory_space<vmem>>, %arg10: memref<16x32xf32, #tpu.memory_space<vmem>>) attributes {dimension_semantics = [#tpu.dimension_semantics<parallel>, #tpu.dimension_semantics<arbitrary>], iteration_bounds = array<i64: 2, 3>, scalar_prefetch = 0 : i64, scratch_operands = 3 : i64, tpu.core_type = #tpu.core_type<tc>, window_params = [{transform_indices = @transform_0, window_bounds = array<i64: 1, 16, 32>}, {pipeline_mode = #tpu.pipeline_mode<synchronous>, transform_indices = @transform_1, window_bounds = array<i64: 32, 256>}, {pipeline_mode = #tpu.pipeline_mode<synchronous>, transform_indices = @transform_2, window_bounds = array<i64: 1, 256>}, {pipeline_mode = #tpu.pipeline_mode<synchronous>, transform_indices = @transform_3, window_bounds = array<i64: 128, 16>}, {pipeline_mode = #tpu.pipeline_mode<synchronous>, transform_indices = @transform_4, window_bounds = array<i64: 1, 16>}, {transform_indices = @transform_5, window_bounds = array<i64: 1, 16, 32>}]} {
    %c0_i32 = arith.constant 0 : i32
    %0 = arith.cmpi eq, %arg1, %c0_i32 : i32
    %1 = arith.extui %0 : i1 to i32
    %c0_i32_0 = arith.constant 0 : i32
    %2 = arith.cmpi ne, %1, %c0_i32_0 : i32
    scf.if %2 {
      %cst_30 = arith.constant -1.000000e+30 : f32
      %58 = vector.broadcast %cst_30 : f32 to vector<1x16xf32>
      %c0_31 = arith.constant 0 : index
      %c0_32 = arith.constant 0 : index
      %59 = vector.load %arg8[%c0_31, %c0_32] : memref<1x16xf32, #tpu.memory_space<vmem>>, vector<1x16xf32>
      tpu.vector_store %arg8[%c0_31, %c0_32], %58 {strides = array<i32>} : memref<1x16xf32, #tpu.memory_space<vmem>>, vector<1x16xf32>,
      %cst_33 = arith.constant 0.000000e+00 : f32
      %60 = vector.broadcast %cst_33 : f32 to vector<1x16xf32>
      %c0_34 = arith.constant 0 : index
      %c0_35 = arith.constant 0 : index
      %61 = vector.load %arg9[%c0_34, %c0_35] : memref<1x16xf32, #tpu.memory_space<vmem>>, vector<1x16xf32>
      tpu.vector_store %arg9[%c0_34, %c0_35], %60 {strides = array<i32>} : memref<1x16xf32, #tpu.memory_space<vmem>>, vector<1x16xf32>,
      %cst_36 = arith.constant 0.000000e+00 : f32
      %62 = vector.broadcast %cst_36 : f32 to vector<16x32xf32>
      %c0_37 = arith.constant 0 : index
      %c0_38 = arith.constant 0 : index
      %63 = vector.load %arg10[%c0_37, %c0_38] : memref<16x32xf32, #tpu.memory_space<vmem>>, vector<16x32xf32>
      tpu.vector_store %arg10[%c0_37, %c0_38], %62 {strides = array<i32>} : memref<16x32xf32, #tpu.memory_space<vmem>>, vector<16x32xf32>,
    } else {
    }
    %c0 = arith.constant 0 : index
    %c0_1 = arith.constant 0 : index
    %c0_2 = arith.constant 0 : index
    %3 = vector.load %arg2[%c0, %c0_1, %c0_2] : memref<1x16x32xf32, #tpu.memory_space<vmem>>, vector<1x16x32xf32>
    %4 = vector.shape_cast %3 : vector<1x16x32xf32> to vector<16x32xf32>
    %c0_3 = arith.constant 0 : index
    %c0_4 = arith.constant 0 : index
    %5 = vector.load %arg3[%c0_3, %c0_4] : memref<32x256xf32, #tpu.memory_space<vmem>>, vector<32x256xf32>
    %cst = arith.constant dense<0.000000e+00> : vector<16x256xf32>
    %6 = tpu.matmul %4, %5, %cst {dimension_numbers = #tpu.dot_dimension_numbers<[1], [0], [0], [1], [0, 0, 1, 1], [], []>} : vector<16x32xf32>, vector<32x256xf32>, vector<16x256xf32> -> vector<16x256xf32>
    %c0_5 = arith.constant 0 : index
    %c0_6 = arith.constant 0 : index
    %7 = vector.load %arg4[%c0_5, %c0_6] : memref<1x256xf32, #tpu.memory_space<vmem>>, vector<1x256xf32>
    %8 = vector.broadcast %7 : vector<1x256xf32> to vector<16x256xf32>
    %9 = arith.addf %6, %8 : vector<16x256xf32>
    %10 = vector.extract_strided_slice %9 {offsets = [0, 0], sizes = [16, 128], strides = [1, 1]} : vector<16x256xf32> to vector<16x128xf32>
    %11 = math.tanh %10 : vector<16x128xf32>
    %12 = vector.extract_strided_slice %9 {offsets = [0, 128], sizes = [16, 128], strides = [1, 1]} : vector<16x256xf32> to vector<16x128xf32>
    %13 = arith.negf %12 : vector<16x128xf32>
    %14 = math.exp %13 : vector<16x128xf32>
    %cst_7 = arith.constant 1.000000e+00 : f32
    %15 = vector.broadcast %cst_7 : f32 to vector<16x128xf32>
    %16 = arith.addf %15, %14 : vector<16x128xf32>
    %17 = arith.divf %15, %16 : vector<16x128xf32>
    %18 = arith.mulf %11, %17 : vector<16x128xf32>
    %c0_8 = arith.constant 0 : index
    %c0_9 = arith.constant 0 : index
    %19 = vector.load %arg5[%c0_8, %c0_9] : memref<128x16xf32, #tpu.memory_space<vmem>>, vector<128x16xf32>
    %cst_10 = arith.constant dense<0.000000e+00> : vector<16x16xf32>
    %20 = tpu.matmul %18, %19, %cst_10 {dimension_numbers = #tpu.dot_dimension_numbers<[1], [0], [0], [1], [0, 0, 1, 1], [], []>} : vector<16x128xf32>, vector<128x16xf32>, vector<16x16xf32> -> vector<16x16xf32>
    %c0_11 = arith.constant 0 : index
    %c0_12 = arith.constant 0 : index
    %21 = vector.load %arg6[%c0_11, %c0_12] : memref<1x16xf32, #tpu.memory_space<vmem>>, vector<1x16xf32>
    %22 = vector.broadcast %21 : vector<1x16xf32> to vector<16x16xf32>
    %23 = arith.addf %20, %22 : vector<16x16xf32>
    %c16_i32 = arith.constant 16 : i32
    %24 = arith.muli %arg1, %c16_i32 : i32
    %25 = tpu.iota {dimensions = array<i32: 0>} : vector<16x16xi32>
    %26 = vector.broadcast %24 : i32 to vector<16x16xi32>
    %27 = arith.addi %26, %25 : vector<16x16xi32>
    %c45_i32 = arith.constant 45 : i32
    %28 = vector.broadcast %c45_i32 : i32 to vector<16x16xi32>
    %29 = arith.cmpi slt, %27, %28 : vector<16x16xi32>
    %cst_13 = arith.constant -1.000000e+30 : f32
    %30 = vector.broadcast %cst_13 : f32 to vector<16x16xf32>
    %31 = arith.select %29, %23, %30 : vector<16x16xi1>, vector<16x16xf32>
    %c0_14 = arith.constant 0 : index
    %c0_15 = arith.constant 0 : index
    %32 = vector.load %arg8[%c0_14, %c0_15] : memref<1x16xf32, #tpu.memory_space<vmem>>, vector<1x16xf32>
    %cst_16 = arith.constant dense<0xFF800000> : vector<16xf32>
    %33 = vector.multi_reduction <maximumf>, %31, %cst_16 [0] : vector<16x16xf32> to vector<16xf32>
    %34 = vector.shape_cast %33 : vector<16xf32> to vector<1x16xf32>
    %35 = arith.maximumf %32, %34 : vector<1x16xf32>
    %36 = arith.subf %32, %35 : vector<1x16xf32>
    %37 = math.exp %36 : vector<1x16xf32>
    %38 = vector.broadcast %35 : vector<1x16xf32> to vector<16x16xf32>
    %39 = arith.subf %31, %38 : vector<16x16xf32>
    %40 = math.exp %39 : vector<16x16xf32>
    %c0_17 = arith.constant 0 : index
    %c0_18 = arith.constant 0 : index
    %41 = vector.load %arg9[%c0_17, %c0_18] : memref<1x16xf32, #tpu.memory_space<vmem>>, vector<1x16xf32>
    %42 = arith.mulf %37, %41 : vector<1x16xf32>
    %cst_19 = arith.constant dense<0.000000e+00> : vector<16xf32>
    %43 = vector.multi_reduction <add>, %40, %cst_19 [0] : vector<16x16xf32> to vector<16xf32>
    %44 = vector.shape_cast %43 : vector<16xf32> to vector<1x16xf32>
    %45 = arith.addf %42, %44 : vector<1x16xf32>
    %c0_20 = arith.constant 0 : index
    %c0_21 = arith.constant 0 : index
    %46 = vector.load %arg9[%c0_20, %c0_21] : memref<1x16xf32, #tpu.memory_space<vmem>>, vector<1x16xf32>
    tpu.vector_store %arg9[%c0_20, %c0_21], %45 {strides = array<i32>} : memref<1x16xf32, #tpu.memory_space<vmem>>, vector<1x16xf32>,
    %cst_22 = arith.constant dense<0.000000e+00> : vector<16x32xf32>
    %47 = tpu.matmul %40, %4, %cst_22 {dimension_numbers = #tpu.dot_dimension_numbers<[0], [0], [1], [1], [0, 1, 1, 1], [], []>} : vector<16x16xf32>, vector<16x32xf32>, vector<16x32xf32> -> vector<16x32xf32>
    %48 = tpu.transpose %37, [1, 0] : vector<1x16xf32> -> vector<16x1xf32>
    %c0_23 = arith.constant 0 : index
    %c0_24 = arith.constant 0 : index
    %49 = vector.load %arg10[%c0_23, %c0_24] : memref<16x32xf32, #tpu.memory_space<vmem>>, vector<16x32xf32>
    %50 = vector.broadcast %48 : vector<16x1xf32> to vector<16x32xf32>
    %51 = arith.mulf %50, %49 : vector<16x32xf32>
    %52 = arith.addf %51, %47 : vector<16x32xf32>
    %c0_25 = arith.constant 0 : index
    %c0_26 = arith.constant 0 : index
    %53 = vector.load %arg10[%c0_25, %c0_26] : memref<16x32xf32, #tpu.memory_space<vmem>>, vector<16x32xf32>
    tpu.vector_store %arg10[%c0_25, %c0_26], %52 {strides = array<i32>} : memref<16x32xf32, #tpu.memory_space<vmem>>, vector<16x32xf32>,
    %c0_27 = arith.constant 0 : index
    %c0_28 = arith.constant 0 : index
    %54 = vector.load %arg8[%c0_27, %c0_28] : memref<1x16xf32, #tpu.memory_space<vmem>>, vector<1x16xf32>
    tpu.vector_store %arg8[%c0_27, %c0_28], %35 {strides = array<i32>} : memref<1x16xf32, #tpu.memory_space<vmem>>, vector<1x16xf32>,
    %c2_i32 = arith.constant 2 : i32
    %55 = arith.cmpi eq, %arg1, %c2_i32 : i32
    %56 = arith.extui %55 : i1 to i32
    %c0_i32_29 = arith.constant 0 : i32
    %57 = arith.cmpi ne, %56, %c0_i32_29 : i32
    scf.if %57 {
      %c0_30 = arith.constant 0 : index
      %c0_31 = arith.constant 0 : index
      %58 = vector.load %arg9[%c0_30, %c0_31] : memref<1x16xf32, #tpu.memory_space<vmem>>, vector<1x16xf32>
      %cst_32 = arith.constant 1.000000e+00 : f32
      %59 = vector.broadcast %cst_32 : f32 to vector<1x16xf32>
      %60 = arith.divf %59, %58 : vector<1x16xf32>
      %c0_33 = arith.constant 0 : index
      %c0_34 = arith.constant 0 : index
      %61 = vector.load %arg10[%c0_33, %c0_34] : memref<16x32xf32, #tpu.memory_space<vmem>>, vector<16x32xf32>
      %62 = tpu.transpose %60, [1, 0] : vector<1x16xf32> -> vector<16x1xf32>
      %63 = vector.broadcast %62 : vector<16x1xf32> to vector<16x32xf32>
      %64 = arith.mulf %61, %63 : vector<16x32xf32>
      %c0_35 = arith.constant 0 : index
      %c0_36 = arith.constant 0 : index
      %c0_37 = arith.constant 0 : index
      %65 = vector.load %arg7[%c0_35, %c0_36, %c0_37] : memref<1x16x32xf32, #tpu.memory_space<vmem>>, vector<1x16x32xf32>
      %66 = vector.shape_cast %65 : vector<1x16x32xf32> to vector<16x32xf32>
      %67 = vector.shape_cast %64 : vector<16x32xf32> to vector<1x16x32xf32>
      tpu.vector_store %arg7[%c0_35, %c0_36, %c0_37], %67 {strides = array<i32>} : memref<1x16x32xf32, #tpu.memory_space<vmem>>, vector<1x16x32xf32>,
    } else {
    }
    return
  }
  func.func @transform_0(%arg0: i32, %arg1: i32) -> (i32, i32, i32) {
    %c0_i32 = arith.constant 0 : i32
    %c0_i32_0 = arith.constant 0 : i32
    return %arg0, %arg1, %c0_i32 : i32, i32, i32
  }
  func.func @transform_1(%arg0: i32, %arg1: i32) -> (i32, i32) {
    %c0_i32 = arith.constant 0 : i32
    %c0_i32_0 = arith.constant 0 : i32
    %c0_i32_1 = arith.constant 0 : i32
    return %c0_i32, %c0_i32_0 : i32, i32
  }
  func.func @transform_2(%arg0: i32, %arg1: i32) -> (i32, i32) {
    %c0_i32 = arith.constant 0 : i32
    %c0_i32_0 = arith.constant 0 : i32
    %c0_i32_1 = arith.constant 0 : i32
    return %c0_i32, %c0_i32_0 : i32, i32
  }
  func.func @transform_3(%arg0: i32, %arg1: i32) -> (i32, i32) {
    %c0_i32 = arith.constant 0 : i32
    %c0_i32_0 = arith.constant 0 : i32
    %c0_i32_1 = arith.constant 0 : i32
    return %c0_i32, %c0_i32_0 : i32, i32
  }
  func.func @transform_4(%arg0: i32, %arg1: i32) -> (i32, i32) {
    %c0_i32 = arith.constant 0 : i32
    %c0_i32_0 = arith.constant 0 : i32
    %c0_i32_1 = arith.constant 0 : i32
    return %c0_i32, %c0_i32_0 : i32, i32
  }
  func.func @transform_5(%arg0: i32, %arg1: i32) -> (i32, i32, i32) {
    %c0_i32 = arith.constant 0 : i32
    %c0_i32_0 = arith.constant 0 : i32
    %c0_i32_1 = arith.constant 0 : i32
    return %arg0, %c0_i32, %c0_i32_0 : i32, i32, i32
  }
}

module attributes {stable_mosaic.version = 11 : i64} {
  func.func @gated_attn_kernel(%arg0: i32, %arg1: i32, %arg2: memref<1x16x32xf32, #tpu.memory_space<vmem>>, %arg3: memref<32x256xf32, #tpu.memory_space<vmem>>, %arg4: memref<1x256xf32, #tpu.memory_space<vmem>>, %arg5: memref<128x16xf32, #tpu.memory_space<vmem>>, %arg6: memref<1x16xf32, #tpu.memory_space<vmem>>, %arg7: memref<1x16x32xf32, #tpu.memory_space<vmem>>, %arg8: memref<1x16xf32, #tpu.memory_space<vmem>>, %arg9: memref<1x16xf32, #tpu.memory_space<vmem>>, %arg10: memref<16x32xf32, #tpu.memory_space<vmem>>) attributes {dimension_semantics = [#tpu.dimension_semantics<parallel>, #tpu.dimension_semantics<arbitrary>], iteration_bounds = array<i64: 2, 3>, scalar_prefetch = 0 : i64, scratch_operands = 3 : i64, tpu.core_type = #tpu.core_type<tc>, window_params = [{transform_indices = @transform_0, window_bounds = array<i64: 1, 16, 32>}, {pipeline_mode = #tpu.pipeline_mode<synchronous>, transform_indices = @transform_1, window_bounds = array<i64: 32, 256>}, {pipeline_mode = #tpu.pipeline_mode<synchronous>, transform_indices = @transform_2, window_bounds = array<i64: 1, 256>}, {pipeline_mode = #tpu.pipeline_mode<synchronous>, transform_indices = @transform_3, window_bounds = array<i64: 128, 16>}, {pipeline_mode = #tpu.pipeline_mode<synchronous>, transform_indices = @transform_4, window_bounds = array<i64: 1, 16>}, {transform_indices = @transform_5, window_bounds = array<i64: 1, 16, 32>}]} {
    %c0_i32 = arith.constant 0 : i32
    %0 = arith.cmpi eq, %arg1, %c0_i32 : i32
    %1 = arith.extui %0 : i1 to i32
    %c0_i32_0 = arith.constant 0 : i32
    %2 = arith.cmpi ne, %1, %c0_i32_0 : i32
    scf.if %2 {
      %cst_30 = arith.constant -1.000000e+30 : f32
      %58 = vector.broadcast %cst_30 : f32 to vector<1x16xf32>
      %c0_31 = arith.constant 0 : index
      %c0_32 = arith.constant 0 : index
      %59 = vector.load %arg8[%c0_31, %c0_32] : memref<1x16xf32, #tpu.memory_space<vmem>>, vector<1x16xf32>
      tpu.vector_store %arg8[%c0_31, %c0_32], %58 {strides = array<i32>} : memref<1x16xf32, #tpu.memory_space<vmem>>, vector<1x16xf32>,
      %cst_33 = arith.constant 0.000000e+00 : f32
      %60 = vector.broadcast %cst_33 : f32 to vector<1x16xf32>
      %c0_34 = arith.constant 0 : index
      %c0_35 = arith.constant 0 : index
      %61 = vector.load %arg9[%c0_34, %c0_35] : memref<1x16xf32, #tpu.memory_space<vmem>>, vector<1x16xf32>
      tpu.vector_store %arg9[%c0_34, %c0_35], %60 {strides = array<i32>} : memref<1x16xf32, #tpu.memory_space<vmem>>, vector<1x16xf32>,
      %cst_36 = arith.constant 0.000000e+00 : f32
      %62 = vector.broadcast %cst_36 : f32 to vector<16x32xf32>
      %c0_37 = arith.constant 0 : index
      %c0_38 = arith.constant 0 : index
      %63 = vector.load %arg10[%c0_37, %c0_38] : memref<16x32xf32, #tpu.memory_space<vmem>>, vector<16x32xf32>
      tpu.vector_store %arg10[%c0_37, %c0_38], %62 {strides = array<i32>} : memref<16x32xf32, #tpu.memory_space<vmem>>, vector<16x32xf32>,
    } else {
    }
    %c0 = arith.constant 0 : index
    %c0_1 = arith.constant 0 : index
    %c0_2 = arith.constant 0 : index
    %3 = vector.load %arg2[%c0, %c0_1, %c0_2] : memref<1x16x32xf32, #tpu.memory_space<vmem>>, vector<1x16x32xf32>
    %4 = vector.shape_cast %3 : vector<1x16x32xf32> to vector<16x32xf32>
    %c0_3 = arith.constant 0 : index
    %c0_4 = arith.constant 0 : index
    %5 = vector.load %arg3[%c0_3, %c0_4] : memref<32x256xf32, #tpu.memory_space<vmem>>, vector<32x256xf32>
    %cst = arith.constant dense<0.000000e+00> : vector<16x256xf32>
    %6 = tpu.matmul %4, %5, %cst {dimension_numbers = #tpu.dot_dimension_numbers<[1], [0], [0], [1], [0, 0, 1, 1], [], []>} : vector<16x32xf32>, vector<32x256xf32>, vector<16x256xf32> -> vector<16x256xf32>
    %c0_5 = arith.constant 0 : index
    %c0_6 = arith.constant 0 : index
    %7 = vector.load %arg4[%c0_5, %c0_6] : memref<1x256xf32, #tpu.memory_space<vmem>>, vector<1x256xf32>
    %8 = vector.broadcast %7 : vector<1x256xf32> to vector<16x256xf32>
    %9 = arith.addf %6, %8 : vector<16x256xf32>
    %10 = vector.extract_strided_slice %9 {offsets = [0, 0], sizes = [16, 128], strides = [1, 1]} : vector<16x256xf32> to vector<16x128xf32>
    %11 = math.tanh %10 : vector<16x128xf32>
    %12 = vector.extract_strided_slice %9 {offsets = [0, 128], sizes = [16, 128], strides = [1, 1]} : vector<16x256xf32> to vector<16x128xf32>
    %13 = arith.negf %12 : vector<16x128xf32>
    %14 = math.exp %13 : vector<16x128xf32>
    %cst_7 = arith.constant 1.000000e+00 : f32
    %15 = vector.broadcast %cst_7 : f32 to vector<16x128xf32>
    %16 = arith.addf %15, %14 : vector<16x128xf32>
    %17 = arith.divf %15, %16 : vector<16x128xf32>
    %18 = arith.mulf %11, %17 : vector<16x128xf32>
    %c0_8 = arith.constant 0 : index
    %c0_9 = arith.constant 0 : index
    %19 = vector.load %arg5[%c0_8, %c0_9] : memref<128x16xf32, #tpu.memory_space<vmem>>, vector<128x16xf32>
    %cst_10 = arith.constant dense<0.000000e+00> : vector<16x16xf32>
    %20 = tpu.matmul %18, %19, %cst_10 {dimension_numbers = #tpu.dot_dimension_numbers<[1], [0], [0], [1], [0, 0, 1, 1], [], []>} : vector<16x128xf32>, vector<128x16xf32>, vector<16x16xf32> -> vector<16x16xf32>
    %c0_11 = arith.constant 0 : index
    %c0_12 = arith.constant 0 : index
    %21 = vector.load %arg6[%c0_11, %c0_12] : memref<1x16xf32, #tpu.memory_space<vmem>>, vector<1x16xf32>
    %22 = vector.broadcast %21 : vector<1x16xf32> to vector<16x16xf32>
    %23 = arith.addf %20, %22 : vector<16x16xf32>
    %c16_i32 = arith.constant 16 : i32
    %24 = arith.muli %arg1, %c16_i32 : i32
    %25 = tpu.iota {dimensions = array<i32: 0>} : vector<16x16xi32>
    %26 = vector.broadcast %24 : i32 to vector<16x16xi32>
    %27 = arith.addi %26, %25 : vector<16x16xi32>
    %c45_i32 = arith.constant 45 : i32
    %28 = vector.broadcast %c45_i32 : i32 to vector<16x16xi32>
    %29 = arith.cmpi slt, %27, %28 : vector<16x16xi32>
    %cst_13 = arith.constant -1.000000e+30 : f32
    %30 = vector.broadcast %cst_13 : f32 to vector<16x16xf32>
    %31 = arith.select %29, %23, %30 : vector<16x16xi1>, vector<16x16xf32>
    %c0_14 = arith.constant 0 : index
    %c0_15 = arith.constant 0 : index
    %32 = vector.load %arg8[%c0_14, %c0_15] : memref<1x16xf32, #tpu.memory_space<vmem>>, vector<1x16xf32>
    %cst_16 = arith.constant dense<0xFF800000> : vector<16xf32>
    %33 = vector.multi_reduction <maximumf>, %31, %cst_16 [0] : vector<16x16xf32> to vector<16xf32>
    %34 = vector.shape_cast %33 : vector<16xf32> to vector<1x16xf32>
    %35 = arith.maximumf %32, %34 : vector<1x16xf32>
    %36 = arith.subf %32, %35 : vector<1x16xf32>
    %37 = math.exp %36 : vector<1x16xf32>
    %38 = vector.broadcast %35 : vector<1x16xf32> to vector<16x16xf32>
    %39 = arith.subf %31, %38 : vector<16x16xf32>
    %40 = math.exp %39 : vector<16x16xf32>
    %c0_17 = arith.constant 0 : index
    %c0_18 = arith.constant 0 : index
    %41 = vector.load %arg9[%c0_17, %c0_18] : memref<1x16xf32, #tpu.memory_space<vmem>>, vector<1x16xf32>
    %42 = arith.mulf %37, %41 : vector<1x16xf32>
    %cst_19 = arith.constant dense<0.000000e+00> : vector<16xf32>
    %43 = vector.multi_reduction <add>, %40, %cst_19 [0] : vector<16x16xf32> to vector<16xf32>
    %44 = vector.shape_cast %43 : vector<16xf32> to vector<1x16xf32>
    %45 = arith.addf %42, %44 : vector<1x16xf32>
    %c0_20 = arith.constant 0 : index
    %c0_21 = arith.constant 0 : index
    %46 = vector.load %arg9[%c0_20, %c0_21] : memref<1x16xf32, #tpu.memory_space<vmem>>, vector<1x16xf32>
    tpu.vector_store %arg9[%c0_20, %c0_21], %45 {strides = array<i32>} : memref<1x16xf32, #tpu.memory_space<vmem>>, vector<1x16xf32>,
    %cst_22 = arith.constant dense<0.000000e+00> : vector<16x32xf32>
    %47 = tpu.matmul %40, %4, %cst_22 {dimension_numbers = #tpu.dot_dimension_numbers<[0], [0], [1], [1], [0, 1, 1, 1], [], []>} : vector<16x16xf32>, vector<16x32xf32>, vector<16x32xf32> -> vector<16x32xf32>
    %48 = tpu.transpose %37, [1, 0] : vector<1x16xf32> -> vector<16x1xf32>
    %c0_23 = arith.constant 0 : index
    %c0_24 = arith.constant 0 : index
    %49 = vector.load %arg10[%c0_23, %c0_24] : memref<16x32xf32, #tpu.memory_space<vmem>>, vector<16x32xf32>
    %50 = vector.broadcast %48 : vector<16x1xf32> to vector<16x32xf32>
    %51 = arith.mulf %50, %49 : vector<16x32xf32>
    %52 = arith.addf %51, %47 : vector<16x32xf32>
    %c0_25 = arith.constant 0 : index
    %c0_26 = arith.constant 0 : index
    %53 = vector.load %arg10[%c0_25, %c0_26] : memref<16x32xf32, #tpu.memory_space<vmem>>, vector<16x32xf32>
    tpu.vector_store %arg10[%c0_25, %c0_26], %52 {strides = array<i32>} : memref<16x32xf32, #tpu.memory_space<vmem>>, vector<16x32xf32>,
    %c0_27 = arith.constant 0 : index
    %c0_28 = arith.constant 0 : index
    %54 = vector.load %arg8[%c0_27, %c0_28] : memref<1x16xf32, #tpu.memory_space<vmem>>, vector<1x16xf32>
    tpu.vector_store %arg8[%c0_27, %c0_28], %35 {strides = array<i32>} : memref<1x16xf32, #tpu.memory_space<vmem>>, vector<1x16xf32>,
    %c2_i32 = arith.constant 2 : i32
    %55 = arith.cmpi eq, %arg1, %c2_i32 : i32
    %56 = arith.extui %55 : i1 to i32
    %c0_i32_29 = arith.constant 0 : i32
    %57 = arith.cmpi ne, %56, %c0_i32_29 : i32
    scf.if %57 {
      %c0_30 = arith.constant 0 : index
      %c0_31 = arith.constant 0 : index
      %58 = vector.load %arg9[%c0_30, %c0_31] : memref<1x16xf32, #tpu.memory_space<vmem>>, vector<1x16xf32>
      %cst_32 = arith.constant 1.000000e+00 : f32
      %59 = vector.broadcast %cst_32 : f32 to vector<1x16xf32>
      %60 = arith.divf %59, %58 : vector<1x16xf32>
      %c0_33 = arith.constant 0 : index
      %c0_34 = arith.constant 0 : index
      %61 = vector.load %arg10[%c0_33, %c0_34] : memref<16x32xf32, #tpu.memory_space<vmem>>, vector<16x32xf32>
      %62 = tpu.transpose %60, [1, 0] : vector<1x16xf32> -> vector<16x1xf32>
      %63 = vector.broadcast %62 : vector<16x1xf32> to vector<16x32xf32>
      %64 = arith.mulf %61, %63 : vector<16x32xf32>
      %c0_35 = arith.constant 0 : index
      %c0_36 = arith.constant 0 : index
      %c0_37 = arith.constant 0 : index
      %65 = vector.load %arg7[%c0_35, %c0_36, %c0_37] : memref<1x16x32xf32, #tpu.memory_space<vmem>>, vector<1x16x32xf32>
      %66 = vector.shape_cast %65 : vector<1x16x32xf32> to vector<16x32xf32>
      %67 = vector.shape_cast %64 : vector<16x32xf32> to vector<1x16x32xf32>
      tpu.vector_store %arg7[%c0_35, %c0_36, %c0_37], %67 {strides = array<i32>} : memref<1x16x32xf32, #tpu.memory_space<vmem>>, vector<1x16x32xf32>,
    } else {
    }
    return
  }
  func.func @transform_0(%arg0: i32, %arg1: i32) -> (i32, i32, i32) {
    %c0_i32 = arith.constant 0 : i32
    %c0_i32_0 = arith.constant 0 : i32
    return %arg0, %arg1, %c0_i32 : i32, i32, i32
  }
  func.func @transform_1(%arg0: i32, %arg1: i32) -> (i32, i32) {
    %c0_i32 = arith.constant 0 : i32
    %c0_i32_0 = arith.constant 0 : i32
    %c0_i32_1 = arith.constant 0 : i32
    return %c0_i32, %c0_i32_0 : i32, i32
  }
  func.func @transform_2(%arg0: i32, %arg1: i32) -> (i32, i32) {
    %c0_i32 = arith.constant 0 : i32
    %c0_i32_0 = arith.constant 0 : i32
    %c0_i32_1 = arith.constant 0 : i32
    return %c0_i32, %c0_i32_0 : i32, i32
  }
  func.func @transform_3(%arg0: i32, %arg1: i32) -> (i32, i32) {
    %c0_i32 = arith.constant 0 : i32
    %c0_i32_0 = arith.constant 0 : i32
    %c0_i32_1 = arith.constant 0 : i32
    return %c0_i32, %c0_i32_0 : i32, i32
  }
  func.func @transform_4(%arg0: i32, %arg1: i32) -> (i32, i32) {
    %c0_i32 = arith.constant 0 : i32
    %c0_i32_0 = arith.constant 0 : i32
    %c0_i32_1 = arith.constant 0 : i32
    return %c0_i32, %c0_i32_0 : i32, i32
  }
  func.func @transform_5(%arg0: i32, %arg1: i32) -> (i32, i32, i32) {
    %c0_i32 = arith.constant 0 : i32
    %c0_i32_0 = arith.constant 0 : i32
    %c0_i32_1 = arith.constant 0 : i32
    return %arg0, %c0_i32, %c0_i32_0 : i32, i32, i32
  }
}

</mosaic_0001>

<llo_original>
// kernel: tpu_custom_call.1
$region0: #{tpu_custom_call.1}
  #allocation0 [shape = 'u32[]', space=smem, size = 0x4, offset = 0x4, fixed_abs, tag = 'smem constant byte address 0x4 - core index']
  #allocation1 [shape = 'u32[144,128]{1,0:T(1,128)}', space=vmem, size = 0x12000, scoped, tag = 'internal scratch']
  #allocation2 [shape = 'f32[1,16]{1,0:T(1,128)}', space=vmem, size = 0x200, scoped, tag = 'scratch operand']
  #allocation3 [shape = 'f32[1,16]{1,0:T(1,128)}', space=vmem, size = 0x200, scoped, tag = 'scratch operand']
  #allocation4 [shape = 'f32[16,32]{1,0:T(8,128)}', space=vmem, size = 0x2000, scoped, tag = 'scratch operand']
  %s0 = inlined_call_operand.vmem [shape: f32[2,48,32], index: 0, kind: input, shape index: {}]
  %s1 = inlined_call_operand.vmem [shape: f32[32,256], index: 1, kind: input, shape index: {}]
  %s2 = inlined_call_operand.vmem [shape: f32[1,256], index: 2, kind: input, shape index: {}]
  %s3 = inlined_call_operand.vmem [shape: f32[128,16], index: 3, kind: input, shape index: {}]
  %s4 = inlined_call_operand.vmem [shape: f32[1,16], index: 4, kind: input, shape index: {}]
  %s5 = inlined_call_operand.hbm [shape: f32[2,16,32], index: 5, kind: output, shape index: {}]
  %s6 = sld [smem:[#allocation0]]
  $region61: #{tpu_custom_call.1} parent=0
    _
  %s8 = ssub.s32 1, %s6
  %s9 = scalar_select 0, %s8, %s6
  $region1: #{tpu_custom_call.1} parent=0
    #allocation5 [shape = 'u8[16384]{0}', space=vmem, size = 0x4000, scoped, tag = 'output window, operand 0']
    #allocation6 [shape = 's32[2]{0}', space=sflag, size = 0x8, scoped, tag = 'scoped memory for tpu_custom_call.1']
    %10 = vsyncpa [#allocation6], 0
    %s11 = scalar_lea.sflag [#allocation6], 1
    %12 = vsyncpa %s11, 0
    loop: start=0, step=1, limit=8
    $region2: #{tpu_custom_call.1} parent=1 // loop_pre_header
      _
    $region3: #{tpu_custom_call.1} parent=1 // loop_header
      %s14 = sphi 0, %s18
      %p15 = scmp.ge.s32.totalorder %s14, 8
      %s21 = sphi 0, %s33
      %s22 = sphi 0, %s29
      %s23 = sphi 0, %s21
      %s24 = sphi 0, %s22
      %s25 = sphi 0, %s23
      %s26 = sphi 0, %s24
      %s38 = sphi 0, %s40
      %s41 = sphi 0, %s38
      %s42 = sphi 0, %s41
      %s58 = sphi 0, %s42
      %s62 = sphi 0, %s62
      %s64 = sphi 0, %s62
      %s65 = sphi 0, %s64
      %s79 = sphi 0, %s65
      %s83 = sphi 0, %s83
      %s85 = sphi 0, %s83
      %s86 = sphi 0, %s85
      %s100 = sphi 0, %s86
      %s104 = sphi 0, %s104
      %s106 = sphi 0, %s104
      %s107 = sphi 0, %s106
      %s121 = sphi 0, %s107
      %s125 = sphi 0, %s125
      %s127 = sphi 0, %s125
      %s128 = sphi 0, %s127
      %s142 = sphi 0, %s128
      %s148 = sphi 0, %s150
      %s151 = sphi 0, %s148
      %s152 = sphi 0, %s151
      %s168 = sphi 0, %s152
    $region4: #{tpu_custom_call.1} parent=1 // loop_header_branch
      %17 = sbr.rel (%p15) target = $region8
    $region5: #{tpu_custom_call.1} parent=1 // loop_body
      %s19 = ssub.s32 %s14, 1
      %s20 = ssub.s32 %s14, 2
      %s27 = sadd.s32 1, %s22
      %p28 = scmp.ge.s32.totalorder %s27, 3
      %s29 = scalar_select %p28, 0, %s27
      %s30 = sadd.s32 1, %s21
      %s31 = scalar_select %p28, %s30, %s21
      %p32 = scmp.ge.s32.totalorder %s31, 2
      %s33 = scalar_select %p32, 0, %s31
      %s34 = ssub.s32 %s21, %s33
      %s35 = ssub.s32 %s22, %s29
      %s36 = sor.u32 %s34, %s35
      %p37 = scmp.eq.s32.totalorder %s36, 0
      %s39 = sadd.s32 %s38, 1
      %s40 = scalar_select %p37, %s38, %s39
      %p43 = pneg %p37
      %p44 = scmp.eq.s32.totalorder %s14, 5
      %p45 = por %p43, %p44
      %p46 = scmp.ne.s32.totalorder %s38, %s41
      %p47 = scmp.eq.s32.totalorder %s14, 0
      %p48 = por %p46, %p47
      %p49 = scmp.ne.s32.totalorder %s38, %s41
      %p50 = scmp.eq.s32.totalorder %s19, 5
      %p51 = por %p49, %p50
      %p52 = scmp.ne.s32.totalorder %s41, %s42
      %p53 = scmp.eq.s32.totalorder %s19, 0
      %p54 = por %p52, %p53
      %p55 = scmp.ne.s32.totalorder %s41, %s42
      %p56 = scmp.eq.s32.totalorder %s20, 5
      %p57 = por %p55, %p56
      %p59 = scmp.ne.s32.totalorder %s42, %s58
      %p60 = scmp.eq.s32.totalorder %s20, 0
      %p61 = por %p59, %p60
      %s63 = sadd.s32 %s62, 1
      %p66 = scmp.eq.s32.totalorder %s14, 5
      %p67 = scmp.ne.s32.totalorder %s62, %s64
      %p68 = scmp.eq.s32.totalorder %s14, 0
      %p69 = por %p67, %p68
      %p70 = scmp.ne.s32.totalorder %s62, %s64
      %p71 = scmp.eq.s32.totalorder %s19, 5
      %p72 = por %p70, %p71
      %p73 = scmp.ne.s32.totalorder %s64, %s65
      %p74 = scmp.eq.s32.totalorder %s19, 0
      %p75 = por %p73, %p74
      %p76 = scmp.ne.s32.totalorder %s64, %s65
      %p77 = scmp.eq.s32.totalorder %s20, 5
      %p78 = por %p76, %p77
      %p80 = scmp.ne.s32.totalorder %s65, %s79
      %p81 = scmp.eq.s32.totalorder %s20, 0
      %p82 = por %p80, %p81
      %s84 = sadd.s32 %s83, 1
      %p87 = scmp.eq.s32.totalorder %s14, 5
      %p88 = scmp.ne.s32.totalorder %s83, %s85
      %p89 = scmp.eq.s32.totalorder %s14, 0
      %p90 = por %p88, %p89
      %p91 = scmp.ne.s32.totalorder %s83, %s85
      %p92 = scmp.eq.s32.totalorder %s19, 5
      %p93 = por %p91, %p92
      %p94 = scmp.ne.s32.totalorder %s85, %s86
      %p95 = scmp.eq.s32.totalorder %s19, 0
      %p96 = por %p94, %p95
      %p97 = scmp.ne.s32.totalorder %s85, %s86
      %p98 = scmp.eq.s32.totalorder %s20, 5
      %p99 = por %p97, %p98
      %p101 = scmp.ne.s32.totalorder %s86, %s100
      %p102 = scmp.eq.s32.totalorder %s20, 0
      %p103 = por %p101, %p102
      %s105 = sadd.s32 %s104, 1
      %p108 = scmp.eq.s32.totalorder %s14, 5
      %p109 = scmp.ne.s32.totalorder %s104, %s106
      %p110 = scmp.eq.s32.totalorder %s14, 0
      %p111 = por %p109, %p110
      %p112 = scmp.ne.s32.totalorder %s104, %s106
      %p113 = scmp.eq.s32.totalorder %s19, 5
      %p114 = por %p112, %p113
      %p115 = scmp.ne.s32.totalorder %s106, %s107
      %p116 = scmp.eq.s32.totalorder %s19, 0
      %p117 = por %p115, %p116
      %p118 = scmp.ne.s32.totalorder %s106, %s107
      %p119 = scmp.eq.s32.totalorder %s20, 5
      %p120 = por %p118, %p119
      %p122 = scmp.ne.s32.totalorder %s107, %s121
      %p123 = scmp.eq.s32.totalorder %s20, 0
      %p124 = por %p122, %p123
      %s126 = sadd.s32 %s125, 1
      %p129 = scmp.eq.s32.totalorder %s14, 5
      %p130 = scmp.ne.s32.totalorder %s125, %s127
      %p131 = scmp.eq.s32.totalorder %s14, 0
      %p132 = por %p130, %p131
      %p133 = scmp.ne.s32.totalorder %s125, %s127
      %p134 = scmp.eq.s32.totalorder %s19, 5
      %p135 = por %p133, %p134
      %p136 = scmp.ne.s32.totalorder %s127, %s128
      %p137 = scmp.eq.s32.totalorder %s19, 0
      %p138 = por %p136, %p137
      %p139 = scmp.ne.s32.totalorder %s127, %s128
      %p140 = scmp.eq.s32.totalorder %s20, 5
      %p141 = por %p139, %p140
      %p143 = scmp.ne.s32.totalorder %s128, %s142
      %p144 = scmp.eq.s32.totalorder %s20, 0
      %p145 = por %p143, %p144
      %s146 = ssub.s32 %s21, %s33
      %p147 = scmp.eq.s32.totalorder %s146, 0
      %s149 = sadd.s32 %s148, 1
      %s150 = scalar_select %p147, %s148, %s149
      %p153 = pneg %p147
      %p154 = scmp.eq.s32.totalorder %s14, 5
      %p155 = por %p153, %p154
      %p156 = scmp.ne.s32.totalorder %s148, %s151
      %p157 = scmp.eq.s32.totalorder %s14, 0
      %p158 = por %p156, %p157
      %p159 = scmp.ne.s32.totalorder %s148, %s151
      %p160 = scmp.eq.s32.totalorder %s19, 5
      %p161 = por %p159, %p160
      %p162 = scmp.ne.s32.totalorder %s151, %s152
      %p163 = scmp.eq.s32.totalorder %s19, 0
      %p164 = por %p162, %p163
      %p165 = scmp.ne.s32.totalorder %s151, %s152
      %p166 = scmp.eq.s32.totalorder %s20, 5
      %p167 = por %p165, %p166
      %p169 = scmp.ne.s32.totalorder %s152, %s168
      %p170 = scmp.eq.s32.totalorder %s20, 0
      %p171 = por %p169, %p170
      %p172 = scmp.le.s32.totalorder 1, %s14
      %p173 = scmp.lt.s32.totalorder %s14, 7
      %p174 = pnand %p172, %p173
      %p175 = pneg %p174
      // Predicated region
      $region9: #{tpu_custom_call.1} parent=5 // pred_check
        _
      $region10: #{tpu_custom_call.1} parent=5 // pred_check_branch
        %177 = sbr.rel (%p174) target = $region12
      $region11: #{tpu_custom_call.1} parent=5 // pred_region
        %s178 = ssub.s32 %s14, 1
        // Predicated region
        $region13: #{tpu_custom_call.1} parent=11 // pred_check
          %p179 = pneg %p75
        $region14: #{tpu_custom_call.1} parent=11 // pred_check_branch
          %181 = sbr.rel (%p179) target = $region16
        $region15: #{tpu_custom_call.1} parent=11 // pred_region
          _
        $region16: #{tpu_custom_call.1} parent=11 // pred_fallthru
          _
        // Predicated region
        $region17: #{tpu_custom_call.1} parent=11 // pred_check
          %p182 = pneg %p96
        $region18: #{tpu_custom_call.1} parent=11 // pred_check_branch
          %184 = sbr.rel (%p182) target = $region20
        $region19: #{tpu_custom_call.1} parent=11 // pred_region
          _
        $region20: #{tpu_custom_call.1} parent=11 // pred_fallthru
          _
        // Predicated region
        $region21: #{tpu_custom_call.1} parent=11 // pred_check
          %p185 = pneg %p117
        $region22: #{tpu_custom_call.1} parent=11 // pred_check_branch
          %187 = sbr.rel (%p185) target = $region24
        $region23: #{tpu_custom_call.1} parent=11 // pred_region
          _
        $region24: #{tpu_custom_call.1} parent=11 // pred_fallthru
          _
        // Predicated region
        $region25: #{tpu_custom_call.1} parent=11 // pred_check
          %p188 = pneg %p138
        $region26: #{tpu_custom_call.1} parent=11 // pred_check_branch
          %190 = sbr.rel (%p188) target = $region28
        $region27: #{tpu_custom_call.1} parent=11 // pred_region
          _
        $region28: #{tpu_custom_call.1} parent=11 // pred_fallthru
          _
      $region12: #{tpu_custom_call.1} parent=5 // pred_fallthru
        _
      %p191 = scmp.lt.s32.totalorder %s14, 6
      // Predicated region
      $region29: #{tpu_custom_call.1} parent=5 // pred_check
        %p192 = pneg %p191
      $region30: #{tpu_custom_call.1} parent=5 // pred_check_branch
        %194 = sbr.rel (%p192) target = $region32
      $region31: #{tpu_custom_call.1} parent=5 // pred_region
        // Predicated region
        $region33: #{tpu_custom_call.1} parent=31 // pred_check
          %p195 = pneg %p48
        $region34: #{tpu_custom_call.1} parent=31 // pred_check_branch
          %197 = sbr.rel (%p195) target = $region36
        $region35: #{tpu_custom_call.1} parent=31 // pred_region
          %s198 = smul.u32 2, %s22
          %p199 = scmp.lt.s32.totalorder %s21, 1
          %s200 = scalar_select %p199, %s21, 1
          %p201 = scmp.lt.s32.totalorder %s198, 5
          %s202 = scalar_select %p201, %s198, 5
          %s203 = smul.addr %s200, 6
          %s204 = sadd.s32 %s202, %s203
          %s205 = smul.addr %s204, 8
          %s206 = scalar_lea.vmem %s0, %s205
          %s207 = smul.u32 2, %s22
        $region36: #{tpu_custom_call.1} parent=31 // pred_fallthru
          _
      $region32: #{tpu_custom_call.1} parent=5 // pred_fallthru
        _
      %p208 = scmp.le.s32.totalorder 1, %s14
      %p209 = scmp.lt.s32.totalorder %s14, 7
      %p210 = pnand %p208, %p209
      %p211 = pneg %p210
      // Predicated region
      $region37: #{tpu_custom_call.1} parent=5 // pred_check
        _
      $region38: #{tpu_custom_call.1} parent=5 // pred_check_branch
        %213 = sbr.rel (%p210) target = $region40
      $region39: #{tpu_custom_call.1} parent=5 // pred_region
        %s214 = ssub.s32 %s14, 1
        %s215 = smul.u32 2, %s24
        %p216 = scmp.lt.s32.totalorder %s23, 1
        %s217 = scalar_select %p216, %s23, 1
        %p218 = scmp.lt.s32.totalorder %s215, 5
        %s219 = scalar_select %p218, %s215, 5
        %s220 = smul.addr %s217, 6
        %s221 = sadd.s32 %s219, %s220
        %s222 = smul.addr %s221, 8
        %s223 = scalar_lea.vmem %s0, %s222
        %p224 = pneg %p54
        %p225 = pneg %p51
        %p226 = pneg %p75
        %p227 = pneg %p72
        %p228 = pneg %p96
        %p229 = pneg %p93
        %p230 = pneg %p117
        %p231 = pneg %p114
        %p232 = pneg %p138
        %p233 = pneg %p135
        %p234 = pneg %p164
        %p235 = pneg %p161
        %s236 = sand.u32 %s151, 1
        %s237 = scalar_lea.sflag [#allocation6], %s236
        %s238 = sand.u32 %s151, 1
        %s239 = smul.addr %s238, 16
        %s240 = scalar_lea.vmem [#allocation5], %s239
        %s241 = smul.u32 2, %s24
        %p242 = scmp.lt.s32.totalorder %s23, 1
        %s243 = scalar_select %p242, %s23, 1
        %p244 = scmp.lt.s32.totalorder %s241, 5
        %s245 = scalar_select %p244, %s241, 5
        %s246 = smul.addr %s243, 6
        %s247 = sadd.s32 %s245, %s246
        %s248 = smul.addr %s247, 8
        %s249 = scalar_lea.vmem %s0, %s248
        %s250 = smul.u32 2, %s24
        %p251 = scmp.eq.s32.totalorder %s24, 0
        // Predicated region
        $region41: #{tpu_custom_call.1} parent=39 // pred_check
          %p252 = pneg %p251
        $region42: #{tpu_custom_call.1} parent=39 // pred_check_branch
          %254 = sbr.rel (%p252) target = $region44
        $region43: #{tpu_custom_call.1} parent=39 // pred_region
          %vm255 = vcmask 122880
          %256 = vst.msk [vmem:[#allocation2] sm:$0x1] %vm255, -1e+30
          %257 = vst.msk [vmem:[#allocation3] sm:$0x1] %vm255, 0.0
          %vm258 = vcmask 261120
          %259 = vst.msk [vmem:[#allocation4] sm:$0xff] %vm258, 0.0
          %260 = vst.msk [vmem:[#allocation4 + $0x8] sm:$0xff] %vm258, 0.0
        $region44: #{tpu_custom_call.1} parent=39 // pred_fallthru
          _
        %v261 = vld [vmem:[%s249] sm:$0xff]
        %v262 = vld [vmem:[%s249 + $0x8] sm:$0xff]
        %v263 = vld [vmem:[%s1] sm:$0xff]
        %v264 = vld [vmem:[%s1 + $0x8] sm:$0xff]
        %v265 = vld [vmem:[%s1 + $0x10] sm:$0xff]
        %v266 = vld [vmem:[%s1 + $0x18] sm:$0xff]
        %v267 = vld [vmem:[%s1 + $0x20] sm:$0xff]
        %v268 = vld [vmem:[%s1 + $0x28] sm:$0xff]
        %v269 = vld [vmem:[%s1 + $0x30] sm:$0xff]
        %v270 = vld [vmem:[%s1 + $0x38] sm:$0xff]
        %v271 = vld [vmem:[%s2] sm:$0x3]
        %v273 = vlaneseq
        %v274 = vshrl.u32 %v273, 7
        %v275 = vsub.s32 0, %v274
        %v276 = vrot.slane %v271, %v275
        %v277 = vlaneseq
        %v278 = vshrl.u32 %v277, 7
        %v279 = vsub.s32 1, %v278
        %v280 = vrot.slane %v271, %v279
        %vm283 = vcmask 261120
        %v285 = vsel %vm283, %v261, 0
        %v288 = vsel %vm283, %v262, 0
        %290 = vmatprep.subr.mxu0 %v264
        %291 = vmatpush1.msra.mxu0 %v263
        %292 = vmatprep.subr.mxu0 %v266
        %293 = vmatpush1.msra.mxu0 %v265
        %294 = vmatprep.subr.mxu0 %v268
        %295 = vmatpush1.msra.mxu0 %v267
        %296 = vmatprep.subr.mxu0 %v270
        %297 = vmatpush1.msra.mxu0 %v269
        %298 = vmatprep.subr.mxu0 0.0
        %299 = vmatpush1.msra.mxu0 0.0
        %300 = vmatprep.subr.mxu0 0.0
        %301 = vmatpush1.msra.mxu0 0.0
        %302 = vmatprep.subr.mxu0 0.0
        %303 = vmatpush1.msra.mxu0 0.0
        %304 = vmatprep.subr.mxu0 0.0
        %305 = vmatpush1.msra.mxu0 0.0
        %306 = vmatprep.subr.mxu0 0.0
        %307 = vmatpush1.msra.mxu0 0.0
        %308 = vmatprep.subr.mxu0 0.0
        %309 = vmatpush1.msra.mxu0 0.0
        %310 = vmatprep.subr.mxu0 0.0
        %311 = vmatpush1.msra.mxu0 0.0
        %312 = vmatprep.subr.mxu0 0.0
        %313 = vmatpush1.msra.mxu0 0.0
        %314 = vmatprep.subr.mxu0 0.0
        %315 = vmatpush1.msra.mxu0 0.0
        %316 = vmatprep.subr.mxu0 0.0
        %317 = vmatpush1.msra.mxu0 0.0
        %318 = vmatprep.subr.mxu0 0.0
        %319 = vmatpush1.msra.mxu0 0.0
        %320 = vmatprep.subr.mxu0 0.0
        %321 = vmatpush1.msra.mxu0 0.0
        %322 = vmatprep.subr.mxu0 0.0
        %323 = vmatpush1.msra.mxu0 0.0
        %324 = vmatprep.subr.mxu0 0.0
        %325 = vmatpush1.msra.mxu0 0.0
        %326 = vmatprep.subr.mxu0 0.0
        %327 = vmatpush1.msra.mxu0 0.0
        %328 = vmatprep.subr.mxu0 0.0
        %329 = vmatpush1.msra.mxu0 0.0
        %330 = vmatprep.subr.mxu0 0.0
        %331 = vmatpush1.msra.mxu0 0.0
        %332 = vmatprep.subr.mxu0 0.0
        %333 = vmatpush1.msra.mxu0 0.0
        %334 = vmatprep.subr.mxu0 0.0
        %335 = vmatpush1.msra.mxu0 0.0
        %336 = vmatprep.subr.mxu0 0.0
        %337 = vmatpush1.msra.mxu0 0.0
        %338 = vmatprep.subr.mxu0 0.0
        %339 = vmatpush1.msra.mxu0 0.0
        %340 = vmatprep.subr.mxu0 0.0
        %341 = vmatpush1.msra.mxu0 0.0
        %342 = vmatprep.subr.mxu0 0.0
        %343 = vmatpush1.msra.mxu0 0.0
        %344 = vmatprep.subr.mxu0 0.0
        %345 = vmatpush1.msra.mxu0 0.0
        %346 = vmatprep.subr.mxu0 0.0
        %347 = vmatpush1.msra.mxu0 0.0
        %348 = vmatprep.subr.mxu0 0.0
        %349 = vmatpush1.msra.mxu0 0.0
        %350 = vmatprep.subr.mxu0 0.0
        %351 = vmatpush1.msra.mxu0 0.0
        %352 = vmatprep.subr.mxu0 0.0
        %353 = vmatpush1.msra.mxu0 0.0
        %354 = vmatprep.mubr.f32.mxu0 0.0
        %355 = vmatmul.mubr.f32.gmra.mrb[0].mxu0 %v285
        %v356 = vpop.f32.mrb[0].mxu0
        %v357 = vadd.f32 %v276, %v356
        %v358 = vpop.f32.mrb[0].mxu0
        %v359 = vadd.f32 %v280, %v358
        %360 = vmatprep.mubr.f32.mxu0 0.0
        %361 = vmatmul.mubr.f32.gmra.mrb[0].mxu0 %v288
        %v362 = vpop.f32.mrb[0].mxu0
        %v363 = vadd.f32 %v276, %v362
        %v364 = vpop.f32.mrb[0].mxu0
        %v365 = vadd.f32 %v280, %v364
        %366 = vdwg.mxu0
        %v367 = vtanh.pop %v357
        %v368 = vtanh.pop %v363
        %v369 = vxor.u32 %v359, 2147483648
        %v370 = vxor.u32 %v365, 2147483648
        %v371 = vmul.f32 %v369, 1.442695
        %v372 = vpow.pop %v371
        %v373 = vmul.f32 %v370, 1.442695
        %v374 = vpow.pop %v373
        %v375 = vadd.f32 %v372, 1.0
        %v376 = vadd.f32 %v374, 1.0
        %v377 = vrcp.pop %v375
        %v378 = vmul.f32 1.0, %v377
        %v379 = vrcp.pop %v376
        %v380 = vmul.f32 1.0, %v379
        %v381 = vmul.f32 %v367, %v378
        %v382 = vmul.f32 %v368, %v380
        %v383 = vld [vmem:[%s3] sm:$0xff]
        %v384 = vld [vmem:[%s3 + $0x8] sm:$0xff]
        %v385 = vld [vmem:[%s3 + $0x10] sm:$0xff]
        %v386 = vld [vmem:[%s3 + $0x18] sm:$0xff]
        %v387 = vld [vmem:[%s3 + $0x20] sm:$0xff]
        %v388 = vld [vmem:[%s3 + $0x28] sm:$0xff]
        %v389 = vld [vmem:[%s3 + $0x30] sm:$0xff]
        %v390 = vld [vmem:[%s3 + $0x38] sm:$0xff]
        %v391 = vld [vmem:[%s3 + $0x40] sm:$0xff]
        %v392 = vld [vmem:[%s3 + $0x48] sm:$0xff]
        %v393 = vld [vmem:[%s3 + $0x50] sm:$0xff]
        %v394 = vld [vmem:[%s3 + $0x58] sm:$0xff]
        %v395 = vld [vmem:[%s3 + $0x60] sm:$0xff]
        %v396 = vld [vmem:[%s3 + $0x68] sm:$0xff]
        %v397 = vld [vmem:[%s3 + $0x70] sm:$0xff]
        %v398 = vld [vmem:[%s3 + $0x78] sm:$0xff]
        %v399 = vld [vmem:[%s4] sm:$0x1]
        %v401 = vlaneseq
        %v402 = vshrl.u32 %v401, 7
        %v403 = vsub.s32 0, %v402
        %v404 = vrot.slane %v399, %v403
        %406 = vmatprep.subr.mxu0 0.0
        %407 = vmatpush1.msra.mxu0 %v383
        %408 = vmatprep.subr.mxu0 0.0
        %409 = vmatpush1.msra.mxu0 %v384
        %410 = vmatprep.subr.mxu0 0.0
        %411 = vmatpush1.msra.mxu0 %v385
        %412 = vmatprep.subr.mxu0 0.0
        %413 = vmatpush1.msra.mxu0 %v386
        %414 = vmatprep.subr.mxu0 0.0
        %415 = vmatpush1.msra.mxu0 %v387
        %416 = vmatprep.subr.mxu0 0.0
        %417 = vmatpush1.msra.mxu0 %v388
        %418 = vmatprep.subr.mxu0 0.0
        %419 = vmatpush1.msra.mxu0 %v389
        %420 = vmatprep.subr.mxu0 0.0
        %421 = vmatpush1.msra.mxu0 %v390
        %422 = vmatprep.subr.mxu0 0.0
        %423 = vmatpush1.msra.mxu0 %v391
        %424 = vmatprep.subr.mxu0 0.0
        %425 = vmatpush1.msra.mxu0 %v392
        %426 = vmatprep.subr.mxu0 0.0
        %427 = vmatpush1.msra.mxu0 %v393
        %428 = vmatprep.subr.mxu0 0.0
        %429 = vmatpush1.msra.mxu0 %v394
        %430 = vmatprep.subr.mxu0 0.0
        %431 = vmatpush1.msra.mxu0 %v395
        %432 = vmatprep.subr.mxu0 0.0
        %433 = vmatpush1.msra.mxu0 %v396
        %434 = vmatprep.subr.mxu0 0.0
        %435 = vmatpush1.msra.mxu0 %v397
        %436 = vmatprep.subr.mxu0 0.0
        %437 = vmatpush1.msra.mxu0 %v398
        %438 = vmatprep.subr.mxu0 0.0
        %439 = vmatpush1.msra.mxu0 0.0
        %440 = vmatprep.subr.mxu0 0.0
        %441 = vmatpush1.msra.mxu0 0.0
        %442 = vmatprep.subr.mxu0 0.0
        %443 = vmatpush1.msra.mxu0 0.0
        %444 = vmatprep.subr.mxu0 0.0
        %445 = vmatpush1.msra.mxu0 0.0
        %446 = vmatprep.subr.mxu0 0.0
        %447 = vmatpush1.msra.mxu0 0.0
        %448 = vmatprep.subr.mxu0 0.0
        %449 = vmatpush1.msra.mxu0 0.0
        %450 = vmatprep.subr.mxu0 0.0
        %451 = vmatpush1.msra.mxu0 0.0
        %452 = vmatprep.subr.mxu0 0.0
        %453 = vmatpush1.msra.mxu0 0.0
        %454 = vmatprep.subr.mxu0 0.0
        %455 = vmatpush1.msra.mxu0 0.0
        %456 = vmatprep.subr.mxu0 0.0
        %457 = vmatpush1.msra.mxu0 0.0
        %458 = vmatprep.subr.mxu0 0.0
        %459 = vmatpush1.msra.mxu0 0.0
        %460 = vmatprep.subr.mxu0 0.0
        %461 = vmatpush1.msra.mxu0 0.0
        %462 = vmatprep.subr.mxu0 0.0
        %463 = vmatpush1.msra.mxu0 0.0
        %464 = vmatprep.subr.mxu0 0.0
        %465 = vmatpush1.msra.mxu0 0.0
        %466 = vmatprep.subr.mxu0 0.0
        %467 = vmatpush1.msra.mxu0 0.0
        %468 = vmatprep.subr.mxu0 0.0
        %469 = vmatpush1.msra.mxu0 0.0
        %470 = vmatprep.mubr.f32.mxu0 0.0
        %471 = vmatmul.mubr.f32.gmra.mrb[0].mxu0 %v381
        %v472 = vpop.f32.mrb[0].mxu0
        %v473 = vadd.f32 %v404, %v472
        %v474 = vpop.f32.mrb[0].mxu0
        %475 = vmatprep.mubr.f32.mxu0 0.0
        %476 = vmatmul.mubr.f32.gmra.mrb[0].mxu0 %v382
        %v477 = vpop.f32.mrb[0].mxu0
        %v478 = vadd.f32 %v404, %v477
        %v479 = vpop.f32.mrb[0].mxu0
        %480 = vdwg.mxu0
        %s481 = smul.u32 %s24, 16
        %v482 = vlaneseq
        %v483 = vshrl.u32 %v482, 7
        %v484 = vadd.s32 %v483, 8
        %v485 = vstv %s481
        %v486 = vadd.s32 %v485, %v483
        %v487 = vadd.s32 %v485, %v484
        %vm488 = vcmp.lt.s32.totalorder %v486, 45
        %vm489 = vcmp.lt.s32.totalorder %v487, 45
        %v490 = vsel %vm488, %v473, -1e+30
        %v491 = vsel %vm489, %v478, -1e+30
        %v492 = vld [vmem:[#allocation2] sm:$0x1]
        %vm493 = vcmask 130048
        %v494 = vsel %vm493, %v490, -inf
        %v495 = vsel %vm493, %v491, -inf
        %v496 = vmax.f32 %v494, %v495
        %v497 = vrot.slane %v496, 4
        %v498 = vmax.f32 %v496, %v497
        %v499 = vrot.slane %v498, 2
        %v500 = vmax.f32 %v498, %v499
        %v501 = vrot.slane %v500, 1
        %v502 = vmax.f32 %v500, %v501
        %v503 = vmax.f32 %v492, %v502
        %v504 = vsub.f32 %v492, %v503
        %v505 = vmul.f32 %v504, 1.442695
        %v506 = vpow.pop %v505
        %v508 = vlaneseq
        %v509 = vshrl.u32 %v508, 7
        %v510 = vsub.s32 0, %v509
        %v511 = vrot.slane %v503, %v510
        %v513 = vsub.f32 %v490, %v511
        %v514 = vsub.f32 %v491, %v511
        %v515 = vmul.f32 %v513, 1.442695
        %v516 = vpow.pop %v515
        %v517 = vmul.f32 %v514, 1.442695
        %v518 = vpow.pop %v517
        %v519 = vld [vmem:[#allocation3] sm:$0x1]
        %v520 = vmul.f32 %v506, %v519
        %v521 = vsel %vm493, %v516, 0.0
        %v522 = vsel %vm493, %v518, 0.0
        %v523 = vadd.f32 %v521, %v522
        %v524 = vrot.slane %v523, 4
        %v525 = vadd.f32 %v523, %v524
        %v526 = vrot.slane %v525, 2
        %v527 = vadd.f32 %v525, %v526
        %v528 = vrot.slane %v527, 1
        %v529 = vadd.f32 %v527, %v528
        %v530 = vadd.f32 %v520, %v529
        %vm531 = vcmask 122880
        %532 = vst.msk [vmem:[#allocation3] sm:$0x1] %vm531, %v530
        %533 = vxpose.xlu0.b32.start [1/16] %v516, 128
        %534 = vxpose.xlu0.b32.cont [2/16] %v518, 128
        %535 = vxpose.xlu0.b32.cont [3/16] 0.0, 128
        %536 = vxpose.xlu0.b32.cont [4/16] 0.0, 128
        %537 = vxpose.xlu0.b32.cont [5/16] 0.0, 128
        %538 = vxpose.xlu0.b32.cont [6/16] 0.0, 128
        %539 = vxpose.xlu0.b32.cont [7/16] 0.0, 128
        %540 = vxpose.xlu0.b32.cont [8/16] 0.0, 128
        %541 = vxpose.xlu0.b32.cont [9/16] 0.0, 128
        %542 = vxpose.xlu0.b32.cont [10/16] 0.0, 128
        %543 = vxpose.xlu0.b32.cont [11/16] 0.0, 128
        %544 = vxpose.xlu0.b32.cont [12/16] 0.0, 128
        %545 = vxpose.xlu0.b32.cont [13/16] 0.0, 128
        %546 = vxpose.xlu0.b32.cont [14/16] 0.0, 128
        %547 = vxpose.xlu0.b32.cont [15/16] 0.0, 128
        %548 = vxpose.xlu0.b32.end [16/16] 0.0, 128
        %v549 = vpop.trf.xlu0
        %v550 = vpop.trf.xlu0
        %v551 = vpop.trf.xlu0
        %v552 = vpop.trf.xlu0
        %v553 = vpop.trf.xlu0
        %v554 = vpop.trf.xlu0
        %v555 = vpop.trf.xlu0
        %v556 = vpop.trf.xlu0
        %v557 = vpop.trf.xlu0
        %v558 = vpop.trf.xlu0
        %v559 = vpop.trf.xlu0
        %v560 = vpop.trf.xlu0
        %v561 = vpop.trf.xlu0
        %v562 = vpop.trf.xlu0
        %v563 = vpop.trf.xlu0
        %v564 = vpop.trf.xlu0
        %v566 = vsel %vm493, %v549, 0
        %v569 = vsel %vm493, %v550, 0
        %571 = vmatprep.subr.mxu0 0.0
        %572 = vmatpush1.msra.mxu0 %v261
        %573 = vmatprep.subr.mxu0 0.0
        %574 = vmatpush1.msra.mxu0 %v262
        %575 = vmatprep.subr.mxu0 0.0
        %576 = vmatpush1.msra.mxu0 0.0
        %577 = vmatprep.subr.mxu0 0.0
        %578 = vmatpush1.msra.mxu0 0.0
        %579 = vmatprep.subr.mxu0 0.0
        %580 = vmatpush1.msra.mxu0 0.0
        %581 = vmatprep.subr.mxu0 0.0
        %582 = vmatpush1.msra.mxu0 0.0
        %583 = vmatprep.subr.mxu0 0.0
        %584 = vmatpush1.msra.mxu0 0.0
        %585 = vmatprep.subr.mxu0 0.0
        %586 = vmatpush1.msra.mxu0 0.0
        %587 = vmatprep.subr.mxu0 0.0
        %588 = vmatpush1.msra.mxu0 0.0
        %589 = vmatprep.subr.mxu0 0.0
        %590 = vmatpush1.msra.mxu0 0.0
        %591 = vmatprep.subr.mxu0 0.0
        %592 = vmatpush1.msra.mxu0 0.0
        %593 = vmatprep.subr.mxu0 0.0
        %594 = vmatpush1.msra.mxu0 0.0
        %595 = vmatprep.subr.mxu0 0.0
        %596 = vmatpush1.msra.mxu0 0.0
        %597 = vmatprep.subr.mxu0 0.0
        %598 = vmatpush1.msra.mxu0 0.0
        %599 = vmatprep.subr.mxu0 0.0
        %600 = vmatpush1.msra.mxu0 0.0
        %601 = vmatprep.subr.mxu0 0.0
        %602 = vmatpush1.msra.mxu0 0.0
        %603 = vmatprep.subr.mxu0 0.0
        %604 = vmatpush1.msra.mxu0 0.0
        %605 = vmatprep.subr.mxu0 0.0
        %606 = vmatpush1.msra.mxu0 0.0
        %607 = vmatprep.subr.mxu0 0.0
        %608 = vmatpush1.msra.mxu0 0.0
        %609 = vmatprep.subr.mxu0 0.0
        %610 = vmatpush1.msra.mxu0 0.0
        %611 = vmatprep.subr.mxu0 0.0
        %612 = vmatpush1.msra.mxu0 0.0
        %613 = vmatprep.subr.mxu0 0.0
        %614 = vmatpush1.msra.mxu0 0.0
        %615 = vmatprep.subr.mxu0 0.0
        %616 = vmatpush1.msra.mxu0 0.0
        %617 = vmatprep.subr.mxu0 0.0
        %618 = vmatpush1.msra.mxu0 0.0
        %619 = vmatprep.subr.mxu0 0.0
        %620 = vmatpush1.msra.mxu0 0.0
        %621 = vmatprep.subr.mxu0 0.0
        %622 = vmatpush1.msra.mxu0 0.0
        %623 = vmatprep.subr.mxu0 0.0
        %624 = vmatpush1.msra.mxu0 0.0
        %625 = vmatprep.subr.mxu0 0.0
        %626 = vmatpush1.msra.mxu0 0.0
        %627 = vmatprep.subr.mxu0 0.0
        %628 = vmatpush1.msra.mxu0 0.0
        %629 = vmatprep.subr.mxu0 0.0
        %630 = vmatpush1.msra.mxu0 0.0
        %631 = vmatprep.subr.mxu0 0.0
        %632 = vmatpush1.msra.mxu0 0.0
        %633 = vmatprep.subr.mxu0 0.0
        %634 = vmatpush1.msra.mxu0 0.0
        %635 = vmatprep.mubr.f32.mxu0 0.0
        %636 = vmatmul.mubr.f32.gmra.mrb[0].mxu0 %v566
        %v637 = vpop.f32.mrb[0].mxu0
        %v638 = vadd.f32 0.0, %v637
        %v639 = vpop.f32.mrb[0].mxu0
        %640 = vmatprep.mubr.f32.mxu0 0.0
        %641 = vmatmul.mubr.f32.gmra.mrb[0].mxu0 %v569
        %v642 = vpop.f32.mrb[0].mxu0
        %v643 = vadd.f32 0.0, %v642
        %v644 = vpop.f32.mrb[0].mxu0
        %645 = vdwg.mxu0
        %646 = vxpose.xlu0.b32.start [1/16] %v506, 128
        %647 = vxpose.xlu0.b32.cont [2/16] 0.0, 128
        %648 = vxpose.xlu0.b32.cont [3/16] 0.0, 128
        %649 = vxpose.xlu0.b32.cont [4/16] 0.0, 128
        %650 = vxpose.xlu0.b32.cont [5/16] 0.0, 128
        %651 = vxpose.xlu0.b32.cont [6/16] 0.0, 128
        %652 = vxpose.xlu0.b32.cont [7/16] 0.0, 128
        %653 = vxpose.xlu0.b32.cont [8/16] 0.0, 128
        %654 = vxpose.xlu0.b32.cont [9/16] 0.0, 128
        %655 = vxpose.xlu0.b32.cont [10/16] 0.0, 128
        %656 = vxpose.xlu0.b32.cont [11/16] 0.0, 128
        %657 = vxpose.xlu0.b32.cont [12/16] 0.0, 128
        %658 = vxpose.xlu0.b32.cont [13/16] 0.0, 128
        %659 = vxpose.xlu0.b32.cont [14/16] 0.0, 128
        %660 = vxpose.xlu0.b32.cont [15/16] 0.0, 128
        %661 = vxpose.xlu0.b32.end [16/16] 0.0, 128
        %v662 = vpop.trf.xlu0
        %v663 = vpop.trf.xlu0
        %v664 = vpop.trf.xlu0
        %v665 = vpop.trf.xlu0
        %v666 = vpop.trf.xlu0
        %v667 = vpop.trf.xlu0
        %v668 = vpop.trf.xlu0
        %v669 = vpop.trf.xlu0
        %v670 = vpop.trf.xlu0
        %v671 = vpop.trf.xlu0
        %v672 = vpop.trf.xlu0
        %v673 = vpop.trf.xlu0
        %v674 = vpop.trf.xlu0
        %v675 = vpop.trf.xlu0
        %v676 = vpop.trf.xlu0
        %v677 = vpop.trf.xlu0
        %v678 = vld [vmem:[#allocation4] sm:$0xff]
        %v679 = vld [vmem:[#allocation4 + $0x8] sm:$0xff]
        %681 = vset.pattern.permute.xlu0 0
        %682 = vperm.xlu0 %681, %v662
        %v683 = vpop.permute.xlu0 %682
        %686 = vset.pattern.permute.xlu0 0
        %687 = vperm.xlu0 %686, %v663
        %v688 = vpop.permute.xlu0 %687
        %v690 = vmul.f32 %v683, %v678
        %v691 = vmul.f32 %v688, %v679
        %v692 = vadd.f32 %v690, %v638
        %v693 = vadd.f32 %v691, %v643
        %694 = vst.msk [vmem:[#allocation4] sm:$0xff] %vm283, %v692
        %695 = vst.msk [vmem:[#allocation4 + $0x8] sm:$0xff] %vm283, %v693
        %696 = vst.msk [vmem:[#allocation2] sm:$0x1] %vm531, %v503
        %p697 = scmp.eq.s32.totalorder %s24, 2
        // Predicated region
        $region45: #{tpu_custom_call.1} parent=39 // pred_check
          %p698 = pneg %p697
        $region46: #{tpu_custom_call.1} parent=39 // pred_check_branch
          %700 = sbr.rel (%p698) target = $region48
        $region47: #{tpu_custom_call.1} parent=39 // pred_region
          %v701 = vld [vmem:[#allocation3] sm:$0x1]
          %v702 = vrcp.pop %v701
          %v703 = vmul.f32 1.0, %v702
          %v704 = vld [vmem:[#allocation4] sm:$0xff]
          %v705 = vld [vmem:[#allocation4 + $0x8] sm:$0xff]
          %706 = vxpose.xlu0.b32.start [1/16] %v703, 128
          %707 = vxpose.xlu0.b32.cont [2/16] 0.0, 128
          %708 = vxpose.xlu0.b32.cont [3/16] 0.0, 128
          %709 = vxpose.xlu0.b32.cont [4/16] 0.0, 128
          %710 = vxpose.xlu0.b32.cont [5/16] 0.0, 128
          %711 = vxpose.xlu0.b32.cont [6/16] 0.0, 128
          %712 = vxpose.xlu0.b32.cont [7/16] 0.0, 128
          %713 = vxpose.xlu0.b32.cont [8/16] 0.0, 128
          %714 = vxpose.xlu0.b32.cont [9/16] 0.0, 128
          %715 = vxpose.xlu0.b32.cont [10/16] 0.0, 128
          %716 = vxpose.xlu0.b32.cont [11/16] 0.0, 128
          %717 = vxpose.xlu0.b32.cont [12/16] 0.0, 128
          %718 = vxpose.xlu0.b32.cont [13/16] 0.0, 128
          %719 = vxpose.xlu0.b32.cont [14/16] 0.0, 128
          %720 = vxpose.xlu0.b32.cont [15/16] 0.0, 128
          %721 = vxpose.xlu0.b32.end [16/16] 0.0, 128
          %v722 = vpop.trf.xlu0
          %v723 = vpop.trf.xlu0
          %v724 = vpop.trf.xlu0
          %v725 = vpop.trf.xlu0
          %v726 = vpop.trf.xlu0
          %v727 = vpop.trf.xlu0
          %v728 = vpop.trf.xlu0
          %v729 = vpop.trf.xlu0
          %v730 = vpop.trf.xlu0
          %v731 = vpop.trf.xlu0
          %v732 = vpop.trf.xlu0
          %v733 = vpop.trf.xlu0
          %v734 = vpop.trf.xlu0
          %v735 = vpop.trf.xlu0
          %v736 = vpop.trf.xlu0
          %v737 = vpop.trf.xlu0
          %739 = vset.pattern.permute.xlu0 0
          %740 = vperm.xlu0 %739, %v722
          %v741 = vpop.permute.xlu0 %740
          %744 = vset.pattern.permute.xlu0 0
          %745 = vperm.xlu0 %744, %v723
          %v746 = vpop.permute.xlu0 %745
          %v748 = vmul.f32 %v704, %v741
          %v749 = vmul.f32 %v705, %v746
          %750 = vst.msk [vmem:[%s240] sm:$0xff] %vm283, %v748
          %751 = vst.msk [vmem:[%s240 + $0x8] sm:$0xff] %vm283, %v749
        $region48: #{tpu_custom_call.1} parent=39 // pred_fallthru
          _
        %s752 = sand.u32 %s151, 1
        %s753 = scalar_lea.sflag [#allocation6], %s752
        %s754 = sand.u32 %s151, 1
        %s755 = smul.addr %s754, 16
        %s756 = scalar_lea.vmem [#allocation5], %s755
        // Predicated region
        $region49: #{tpu_custom_call.1} parent=39 // pred_check
          %p757 = pneg %p161
        $region50: #{tpu_custom_call.1} parent=39 // pred_check_branch
          %759 = sbr.rel (%p757) target = $region52
        $region51: #{tpu_custom_call.1} parent=39 // pred_region
          %s761 = ssub.s32 256, 256
          %762 = vsyncadd %s753, %s761
          %s763 = smul.addr %s23, 2
          %s764 = smul.addr %s763, 128
          %s765 = scalar_lea.hbm %s5, %s764
          %s766 = sshll.u32 %s756, 4
          %s767 = int_to_ptr.vmem [resolvable:$true] %s766
          %772 = dma.vmem_to_hbm [thread:$0]  %s767, 256, %s765, %s753, 128, 128, 8
        $region52: #{tpu_custom_call.1} parent=39 // pred_fallthru
          _
      $region40: #{tpu_custom_call.1} parent=5 // pred_fallthru
        _
      %p773 = scmp.le.s32.totalorder 2, %s14
      // Predicated region
      $region53: #{tpu_custom_call.1} parent=5 // pred_check
        %p774 = pneg %p773
      $region54: #{tpu_custom_call.1} parent=5 // pred_check_branch
        %776 = sbr.rel (%p774) target = $region56
      $region55: #{tpu_custom_call.1} parent=5 // pred_region
        %s777 = ssub.s32 %s14, 2
        // Predicated region
        $region57: #{tpu_custom_call.1} parent=55 // pred_check
          %p778 = pneg %p167
        $region58: #{tpu_custom_call.1} parent=55 // pred_check_branch
          %780 = sbr.rel (%p778) target = $region60
        $region59: #{tpu_custom_call.1} parent=55 // pred_region
          %s781 = sand.u32 %s152, 1
          %s782 = scalar_lea.sflag [#allocation6], %s781
          %s783 = sand.u32 %s152, 1
          %s784 = smul.addr %s783, 16
          %s785 = scalar_lea.vmem [#allocation5], %s784
          %786 = dma.done %s782, 256
        $region60: #{tpu_custom_call.1} parent=55 // pred_fallthru
          _
      $region56: #{tpu_custom_call.1} parent=5 // pred_fallthru
        _
    $region6: #{tpu_custom_call.1} parent=1 // loop_footer
      %s18 = sadd.s32 1, %s14
    $region7: #{tpu_custom_call.1} parent=1 // loop_footer_branch
      %13 = sbr.rel target = $region3
    $region8: #{tpu_custom_call.1} parent=1 // loop_exit
      _
    %787 = vsyncpa [#allocation6], 1
    %s788 = scalar_lea.sflag [#allocation6], 1
    %789 = vsyncpa %s788, 1

// kernel: tpu_custom_call.1
$region0: #{tpu_custom_call.1}
  #allocation0 [shape = 'u32[]', space=smem, size = 0x4, offset = 0x4, fixed_abs, tag = 'smem constant byte address 0x4 - core index']
  #allocation1 [shape = 'u32[144,128]{1,0:T(1,128)}', space=vmem, size = 0x12000, scoped, tag = 'internal scratch']
  #allocation2 [shape = 'f32[1,16]{1,0:T(1,128)}', space=vmem, size = 0x200, scoped, tag = 'scratch operand']
  #allocation3 [shape = 'f32[1,16]{1,0:T(1,128)}', space=vmem, size = 0x200, scoped, tag = 'scratch operand']
  #allocation4 [shape = 'f32[16,32]{1,0:T(8,128)}', space=vmem, size = 0x2000, scoped, tag = 'scratch operand']
  %s0 = inlined_call_operand.vmem [shape: f32[2,48,32], index: 0, kind: input, shape index: {}]
  %s1 = inlined_call_operand.vmem [shape: f32[32,256], index: 1, kind: input, shape index: {}]
  %s2 = inlined_call_operand.vmem [shape: f32[1,256], index: 2, kind: input, shape index: {}]
  %s3 = inlined_call_operand.vmem [shape: f32[128,16], index: 3, kind: input, shape index: {}]
  %s4 = inlined_call_operand.vmem [shape: f32[1,16], index: 4, kind: input, shape index: {}]
  %s5 = inlined_call_operand.hbm [shape: f32[2,16,32], index: 5, kind: output, shape index: {}]
  %s6 = sld [smem:[#allocation0]]
  $region61: #{tpu_custom_call.1} parent=0
    _
  %s8 = ssub.s32 1, %s6
  %s9 = scalar_select 0, %s8, %s6
  $region1: #{tpu_custom_call.1} parent=0
    #allocation5 [shape = 'u8[16384]{0}', space=vmem, size = 0x4000, scoped, tag = 'output window, operand 0']
    #allocation6 [shape = 's32[2]{0}', space=sflag, size = 0x8, scoped, tag = 'scoped memory for tpu_custom_call.1']
    %10 = vsyncpa [#allocation6], 0
    %s11 = scalar_lea.sflag [#allocation6], 1
    %12 = vsyncpa %s11, 0
    loop: start=0, step=1, limit=8
    $region2: #{tpu_custom_call.1} parent=1 // loop_pre_header
      _
    $region3: #{tpu_custom_call.1} parent=1 // loop_header
      %s14 = sphi 0, %s18
      %p15 = scmp.ge.s32.totalorder %s14, 8
      %s21 = sphi 0, %s33
      %s22 = sphi 0, %s29
      %s23 = sphi 0, %s21
      %s24 = sphi 0, %s22
      %s25 = sphi 0, %s23
      %s26 = sphi 0, %s24
      %s38 = sphi 0, %s40
      %s41 = sphi 0, %s38
      %s42 = sphi 0, %s41
      %s58 = sphi 0, %s42
      %s62 = sphi 0, %s62
      %s64 = sphi 0, %s62
      %s65 = sphi 0, %s64
      %s79 = sphi 0, %s65
      %s83 = sphi 0, %s83
      %s85 = sphi 0, %s83
      %s86 = sphi 0, %s85
      %s100 = sphi 0, %s86
      %s104 = sphi 0, %s104
      %s106 = sphi 0, %s104
      %s107 = sphi 0, %s106
      %s121 = sphi 0, %s107
      %s125 = sphi 0, %s125
      %s127 = sphi 0, %s125
      %s128 = sphi 0, %s127
      %s142 = sphi 0, %s128
      %s148 = sphi 0, %s150
      %s151 = sphi 0, %s148
      %s152 = sphi 0, %s151
      %s168 = sphi 0, %s152
    $region4: #{tpu_custom_call.1} parent=1 // loop_header_branch
      %17 = sbr.rel (%p15) target = $region8
    $region5: #{tpu_custom_call.1} parent=1 // loop_body
      %s19 = ssub.s32 %s14, 1
      %s20 = ssub.s32 %s14, 2
      %s27 = sadd.s32 1, %s22
      %p28 = scmp.ge.s32.totalorder %s27, 3
      %s29 = scalar_select %p28, 0, %s27
      %s30 = sadd.s32 1, %s21
      %s31 = scalar_select %p28, %s30, %s21
      %p32 = scmp.ge.s32.totalorder %s31, 2
      %s33 = scalar_select %p32, 0, %s31
      %s34 = ssub.s32 %s21, %s33
      %s35 = ssub.s32 %s22, %s29
      %s36 = sor.u32 %s34, %s35
      %p37 = scmp.eq.s32.totalorder %s36, 0
      %s39 = sadd.s32 %s38, 1
      %s40 = scalar_select %p37, %s38, %s39
      %p43 = pneg %p37
      %p44 = scmp.eq.s32.totalorder %s14, 5
      %p45 = por %p43, %p44
      %p46 = scmp.ne.s32.totalorder %s38, %s41
      %p47 = scmp.eq.s32.totalorder %s14, 0
      %p48 = por %p46, %p47
      %p49 = scmp.ne.s32.totalorder %s38, %s41
      %p50 = scmp.eq.s32.totalorder %s19, 5
      %p51 = por %p49, %p50
      %p52 = scmp.ne.s32.totalorder %s41, %s42
      %p53 = scmp.eq.s32.totalorder %s19, 0
      %p54 = por %p52, %p53
      %p55 = scmp.ne.s32.totalorder %s41, %s42
      %p56 = scmp.eq.s32.totalorder %s20, 5
      %p57 = por %p55, %p56
      %p59 = scmp.ne.s32.totalorder %s42, %s58
      %p60 = scmp.eq.s32.totalorder %s20, 0
      %p61 = por %p59, %p60
      %s63 = sadd.s32 %s62, 1
      %p66 = scmp.eq.s32.totalorder %s14, 5
      %p67 = scmp.ne.s32.totalorder %s62, %s64
      %p68 = scmp.eq.s32.totalorder %s14, 0
      %p69 = por %p67, %p68
      %p70 = scmp.ne.s32.totalorder %s62, %s64
      %p71 = scmp.eq.s32.totalorder %s19, 5
      %p72 = por %p70, %p71
      %p73 = scmp.ne.s32.totalorder %s64, %s65
      %p74 = scmp.eq.s32.totalorder %s19, 0
      %p75 = por %p73, %p74
      %p76 = scmp.ne.s32.totalorder %s64, %s65
      %p77 = scmp.eq.s32.totalorder %s20, 5
      %p78 = por %p76, %p77
      %p80 = scmp.ne.s32.totalorder %s65, %s79
      %p81 = scmp.eq.s32.totalorder %s20, 0
      %p82 = por %p80, %p81
      %s84 = sadd.s32 %s83, 1
      %p87 = scmp.eq.s32.totalorder %s14, 5
      %p88 = scmp.ne.s32.totalorder %s83, %s85
      %p89 = scmp.eq.s32.totalorder %s14, 0
      %p90 = por %p88, %p89
      %p91 = scmp.ne.s32.totalorder %s83, %s85
      %p92 = scmp.eq.s32.totalorder %s19, 5
      %p93 = por %p91, %p92
      %p94 = scmp.ne.s32.totalorder %s85, %s86
      %p95 = scmp.eq.s32.totalorder %s19, 0
      %p96 = por %p94, %p95
      %p97 = scmp.ne.s32.totalorder %s85, %s86
      %p98 = scmp.eq.s32.totalorder %s20, 5
      %p99 = por %p97, %p98
      %p101 = scmp.ne.s32.totalorder %s86, %s100
      %p102 = scmp.eq.s32.totalorder %s20, 0
      %p103 = por %p101, %p102
      %s105 = sadd.s32 %s104, 1
      %p108 = scmp.eq.s32.totalorder %s14, 5
      %p109 = scmp.ne.s32.totalorder %s104, %s106
      %p110 = scmp.eq.s32.totalorder %s14, 0
      %p111 = por %p109, %p110
      %p112 = scmp.ne.s32.totalorder %s104, %s106
      %p113 = scmp.eq.s32.totalorder %s19, 5
      %p114 = por %p112, %p113
      %p115 = scmp.ne.s32.totalorder %s106, %s107
      %p116 = scmp.eq.s32.totalorder %s19, 0
      %p117 = por %p115, %p116
      %p118 = scmp.ne.s32.totalorder %s106, %s107
      %p119 = scmp.eq.s32.totalorder %s20, 5
      %p120 = por %p118, %p119
      %p122 = scmp.ne.s32.totalorder %s107, %s121
      %p123 = scmp.eq.s32.totalorder %s20, 0
      %p124 = por %p122, %p123
      %s126 = sadd.s32 %s125, 1
      %p129 = scmp.eq.s32.totalorder %s14, 5
      %p130 = scmp.ne.s32.totalorder %s125, %s127
      %p131 = scmp.eq.s32.totalorder %s14, 0
      %p132 = por %p130, %p131
      %p133 = scmp.ne.s32.totalorder %s125, %s127
      %p134 = scmp.eq.s32.totalorder %s19, 5
      %p135 = por %p133, %p134
      %p136 = scmp.ne.s32.totalorder %s127, %s128
      %p137 = scmp.eq.s32.totalorder %s19, 0
      %p138 = por %p136, %p137
      %p139 = scmp.ne.s32.totalorder %s127, %s128
      %p140 = scmp.eq.s32.totalorder %s20, 5
      %p141 = por %p139, %p140
      %p143 = scmp.ne.s32.totalorder %s128, %s142
      %p144 = scmp.eq.s32.totalorder %s20, 0
      %p145 = por %p143, %p144
      %s146 = ssub.s32 %s21, %s33
      %p147 = scmp.eq.s32.totalorder %s146, 0
      %s149 = sadd.s32 %s148, 1
      %s150 = scalar_select %p147, %s148, %s149
      %p153 = pneg %p147
      %p154 = scmp.eq.s32.totalorder %s14, 5
      %p155 = por %p153, %p154
      %p156 = scmp.ne.s32.totalorder %s148, %s151
      %p157 = scmp.eq.s32.totalorder %s14, 0
      %p158 = por %p156, %p157
      %p159 = scmp.ne.s32.totalorder %s148, %s151
      %p160 = scmp.eq.s32.totalorder %s19, 5
      %p161 = por %p159, %p160
      %p162 = scmp.ne.s32.totalorder %s151, %s152
      %p163 = scmp.eq.s32.totalorder %s19, 0
      %p164 = por %p162, %p163
      %p165 = scmp.ne.s32.totalorder %s151, %s152
      %p166 = scmp.eq.s32.totalorder %s20, 5
      %p167 = por %p165, %p166
      %p169 = scmp.ne.s32.totalorder %s152, %s168
      %p170 = scmp.eq.s32.totalorder %s20, 0
      %p171 = por %p169, %p170
      %p172 = scmp.le.s32.totalorder 1, %s14
      %p173 = scmp.lt.s32.totalorder %s14, 7
      %p174 = pnand %p172, %p173
      %p175 = pneg %p174
      // Predicated region
      $region9: #{tpu_custom_call.1} parent=5 // pred_check
        _
      $region10: #{tpu_custom_call.1} parent=5 // pred_check_branch
        %177 = sbr.rel (%p174) target = $region12
      $region11: #{tpu_custom_call.1} parent=5 // pred_region
        %s178 = ssub.s32 %s14, 1
        // Predicated region
        $region13: #{tpu_custom_call.1} parent=11 // pred_check
          %p179 = pneg %p75
        $region14: #{tpu_custom_call.1} parent=11 // pred_check_branch
          %181 = sbr.rel (%p179) target = $region16
        $region15: #{tpu_custom_call.1} parent=11 // pred_region
          _
        $region16: #{tpu_custom_call.1} parent=11 // pred_fallthru
          _
        // Predicated region
        $region17: #{tpu_custom_call.1} parent=11 // pred_check
          %p182 = pneg %p96
        $region18: #{tpu_custom_call.1} parent=11 // pred_check_branch
          %184 = sbr.rel (%p182) target = $region20
        $region19: #{tpu_custom_call.1} parent=11 // pred_region
          _
        $region20: #{tpu_custom_call.1} parent=11 // pred_fallthru
          _
        // Predicated region
        $region21: #{tpu_custom_call.1} parent=11 // pred_check
          %p185 = pneg %p117
        $region22: #{tpu_custom_call.1} parent=11 // pred_check_branch
          %187 = sbr.rel (%p185) target = $region24
        $region23: #{tpu_custom_call.1} parent=11 // pred_region
          _
        $region24: #{tpu_custom_call.1} parent=11 // pred_fallthru
          _
        // Predicated region
        $region25: #{tpu_custom_call.1} parent=11 // pred_check
          %p188 = pneg %p138
        $region26: #{tpu_custom_call.1} parent=11 // pred_check_branch
          %190 = sbr.rel (%p188) target = $region28
        $region27: #{tpu_custom_call.1} parent=11 // pred_region
          _
        $region28: #{tpu_custom_call.1} parent=11 // pred_fallthru
          _
      $region12: #{tpu_custom_call.1} parent=5 // pred_fallthru
        _
      %p191 = scmp.lt.s32.totalorder %s14, 6
      // Predicated region
      $region29: #{tpu_custom_call.1} parent=5 // pred_check
        %p192 = pneg %p191
      $region30: #{tpu_custom_call.1} parent=5 // pred_check_branch
        %194 = sbr.rel (%p192) target = $region32
      $region31: #{tpu_custom_call.1} parent=5 // pred_region
        // Predicated region
        $region33: #{tpu_custom_call.1} parent=31 // pred_check
          %p195 = pneg %p48
        $region34: #{tpu_custom_call.1} parent=31 // pred_check_branch
          %197 = sbr.rel (%p195) target = $region36
        $region35: #{tpu_custom_call.1} parent=31 // pred_region
          %s198 = smul.u32 2, %s22
          %p199 = scmp.lt.s32.totalorder %s21, 1
          %s200 = scalar_select %p199, %s21, 1
          %p201 = scmp.lt.s32.totalorder %s198, 5
          %s202 = scalar_select %p201, %s198, 5
          %s203 = smul.addr %s200, 6
          %s204 = sadd.s32 %s202, %s203
          %s205 = smul.addr %s204, 8
          %s206 = scalar_lea.vmem %s0, %s205
          %s207 = smul.u32 2, %s22
        $region36: #{tpu_custom_call.1} parent=31 // pred_fallthru
          _
      $region32: #{tpu_custom_call.1} parent=5 // pred_fallthru
        _
      %p208 = scmp.le.s32.totalorder 1, %s14
      %p209 = scmp.lt.s32.totalorder %s14, 7
      %p210 = pnand %p208, %p209
      %p211 = pneg %p210
      // Predicated region
      $region37: #{tpu_custom_call.1} parent=5 // pred_check
        _
      $region38: #{tpu_custom_call.1} parent=5 // pred_check_branch
        %213 = sbr.rel (%p210) target = $region40
      $region39: #{tpu_custom_call.1} parent=5 // pred_region
        %s214 = ssub.s32 %s14, 1
        %s215 = smul.u32 2, %s24
        %p216 = scmp.lt.s32.totalorder %s23, 1
        %s217 = scalar_select %p216, %s23, 1
        %p218 = scmp.lt.s32.totalorder %s215, 5
        %s219 = scalar_select %p218, %s215, 5
        %s220 = smul.addr %s217, 6
        %s221 = sadd.s32 %s219, %s220
        %s222 = smul.addr %s221, 8
        %s223 = scalar_lea.vmem %s0, %s222
        %p224 = pneg %p54
        %p225 = pneg %p51
        %p226 = pneg %p75
        %p227 = pneg %p72
        %p228 = pneg %p96
        %p229 = pneg %p93
        %p230 = pneg %p117
        %p231 = pneg %p114
        %p232 = pneg %p138
        %p233 = pneg %p135
        %p234 = pneg %p164
        %p235 = pneg %p161
        %s236 = sand.u32 %s151, 1
        %s237 = scalar_lea.sflag [#allocation6], %s236
        %s238 = sand.u32 %s151, 1
        %s239 = smul.addr %s238, 16
        %s240 = scalar_lea.vmem [#allocation5], %s239
        %s241 = smul.u32 2, %s24
        %p242 = scmp.lt.s32.totalorder %s23, 1
        %s243 = scalar_select %p242, %s23, 1
        %p244 = scmp.lt.s32.totalorder %s241, 5
        %s245 = scalar_select %p244, %s241, 5
        %s246 = smul.addr %s243, 6
        %s247 = sadd.s32 %s245, %s246
        %s248 = smul.addr %s247, 8
        %s249 = scalar_lea.vmem %s0, %s248
        %s250 = smul.u32 2, %s24
        %p251 = scmp.eq.s32.totalorder %s24, 0
        // Predicated region
        $region41: #{tpu_custom_call.1} parent=39 // pred_check
          %p252 = pneg %p251
        $region42: #{tpu_custom_call.1} parent=39 // pred_check_branch
          %254 = sbr.rel (%p252) target = $region44
        $region43: #{tpu_custom_call.1} parent=39 // pred_region
          %vm255 = vcmask 122880
          %256 = vst.msk [vmem:[#allocation2] sm:$0x1] %vm255, -1e+30
          %257 = vst.msk [vmem:[#allocation3] sm:$0x1] %vm255, 0.0
          %vm258 = vcmask 261120
          %259 = vst.msk [vmem:[#allocation4] sm:$0xff] %vm258, 0.0
          %260 = vst.msk [vmem:[#allocation4 + $0x8] sm:$0xff] %vm258, 0.0
        $region44: #{tpu_custom_call.1} parent=39 // pred_fallthru
          _
        %v261 = vld [vmem:[%s249] sm:$0xff]
        %v262 = vld [vmem:[%s249 + $0x8] sm:$0xff]
        %v263 = vld [vmem:[%s1] sm:$0xff]
        %v264 = vld [vmem:[%s1 + $0x8] sm:$0xff]
        %v265 = vld [vmem:[%s1 + $0x10] sm:$0xff]
        %v266 = vld [vmem:[%s1 + $0x18] sm:$0xff]
        %v267 = vld [vmem:[%s1 + $0x20] sm:$0xff]
        %v268 = vld [vmem:[%s1 + $0x28] sm:$0xff]
        %v269 = vld [vmem:[%s1 + $0x30] sm:$0xff]
        %v270 = vld [vmem:[%s1 + $0x38] sm:$0xff]
        %v271 = vld [vmem:[%s2] sm:$0x3]
        %v273 = vlaneseq
        %v274 = vshrl.u32 %v273, 7
        %v275 = vsub.s32 0, %v274
        %v276 = vrot.slane %v271, %v275
        %v277 = vlaneseq
        %v278 = vshrl.u32 %v277, 7
        %v279 = vsub.s32 1, %v278
        %v280 = vrot.slane %v271, %v279
        %vm283 = vcmask 261120
        %v285 = vsel %vm283, %v261, 0
        %v288 = vsel %vm283, %v262, 0
        %290 = vmatprep.subr.mxu0 %v264
        %291 = vmatpush1.msra.mxu0 %v263
        %292 = vmatprep.subr.mxu0 %v266
        %293 = vmatpush1.msra.mxu0 %v265
        %294 = vmatprep.subr.mxu0 %v268
        %295 = vmatpush1.msra.mxu0 %v267
        %296 = vmatprep.subr.mxu0 %v270
        %297 = vmatpush1.msra.mxu0 %v269
        %298 = vmatprep.subr.mxu0 0.0
        %299 = vmatpush1.msra.mxu0 0.0
        %300 = vmatprep.subr.mxu0 0.0
        %301 = vmatpush1.msra.mxu0 0.0
        %302 = vmatprep.subr.mxu0 0.0
        %303 = vmatpush1.msra.mxu0 0.0
        %304 = vmatprep.subr.mxu0 0.0
        %305 = vmatpush1.msra.mxu0 0.0
        %306 = vmatprep.subr.mxu0 0.0
        %307 = vmatpush1.msra.mxu0 0.0
        %308 = vmatprep.subr.mxu0 0.0
        %309 = vmatpush1.msra.mxu0 0.0
        %310 = vmatprep.subr.mxu0 0.0
        %311 = vmatpush1.msra.mxu0 0.0
        %312 = vmatprep.subr.mxu0 0.0
        %313 = vmatpush1.msra.mxu0 0.0
        %314 = vmatprep.subr.mxu0 0.0
        %315 = vmatpush1.msra.mxu0 0.0
        %316 = vmatprep.subr.mxu0 0.0
        %317 = vmatpush1.msra.mxu0 0.0
        %318 = vmatprep.subr.mxu0 0.0
        %319 = vmatpush1.msra.mxu0 0.0
        %320 = vmatprep.subr.mxu0 0.0
        %321 = vmatpush1.msra.mxu0 0.0
        %322 = vmatprep.subr.mxu0 0.0
        %323 = vmatpush1.msra.mxu0 0.0
        %324 = vmatprep.subr.mxu0 0.0
        %325 = vmatpush1.msra.mxu0 0.0
        %326 = vmatprep.subr.mxu0 0.0
        %327 = vmatpush1.msra.mxu0 0.0
        %328 = vmatprep.subr.mxu0 0.0
        %329 = vmatpush1.msra.mxu0 0.0
        %330 = vmatprep.subr.mxu0 0.0
        %331 = vmatpush1.msra.mxu0 0.0
        %332 = vmatprep.subr.mxu0 0.0
        %333 = vmatpush1.msra.mxu0 0.0
        %334 = vmatprep.subr.mxu0 0.0
        %335 = vmatpush1.msra.mxu0 0.0
        %336 = vmatprep.subr.mxu0 0.0
        %337 = vmatpush1.msra.mxu0 0.0
        %338 = vmatprep.subr.mxu0 0.0
        %339 = vmatpush1.msra.mxu0 0.0
        %340 = vmatprep.subr.mxu0 0.0
        %341 = vmatpush1.msra.mxu0 0.0
        %342 = vmatprep.subr.mxu0 0.0
        %343 = vmatpush1.msra.mxu0 0.0
        %344 = vmatprep.subr.mxu0 0.0
        %345 = vmatpush1.msra.mxu0 0.0
        %346 = vmatprep.subr.mxu0 0.0
        %347 = vmatpush1.msra.mxu0 0.0
        %348 = vmatprep.subr.mxu0 0.0
        %349 = vmatpush1.msra.mxu0 0.0
        %350 = vmatprep.subr.mxu0 0.0
        %351 = vmatpush1.msra.mxu0 0.0
        %352 = vmatprep.subr.mxu0 0.0
        %353 = vmatpush1.msra.mxu0 0.0
        %354 = vmatprep.mubr.f32.mxu0 0.0
        %355 = vmatmul.mubr.f32.gmra.mrb[0].mxu0 %v285
        %v356 = vpop.f32.mrb[0].mxu0
        %v357 = vadd.f32 %v276, %v356
        %v358 = vpop.f32.mrb[0].mxu0
        %v359 = vadd.f32 %v280, %v358
        %360 = vmatprep.mubr.f32.mxu0 0.0
        %361 = vmatmul.mubr.f32.gmra.mrb[0].mxu0 %v288
        %v362 = vpop.f32.mrb[0].mxu0
        %v363 = vadd.f32 %v276, %v362
        %v364 = vpop.f32.mrb[0].mxu0
        %v365 = vadd.f32 %v280, %v364
        %366 = vdwg.mxu0
        %v367 = vtanh.pop %v357
        %v368 = vtanh.pop %v363
        %v369 = vxor.u32 %v359, 2147483648
        %v370 = vxor.u32 %v365, 2147483648
        %v371 = vmul.f32 %v369, 1.442695
        %v372 = vpow.pop %v371
        %v373 = vmul.f32 %v370, 1.442695
        %v374 = vpow.pop %v373
        %v375 = vadd.f32 %v372, 1.0
        %v376 = vadd.f32 %v374, 1.0
        %v377 = vrcp.pop %v375
        %v378 = vmul.f32 1.0, %v377
        %v379 = vrcp.pop %v376
        %v380 = vmul.f32 1.0, %v379
        %v381 = vmul.f32 %v367, %v378
        %v382 = vmul.f32 %v368, %v380
        %v383 = vld [vmem:[%s3] sm:$0xff]
        %v384 = vld [vmem:[%s3 + $0x8] sm:$0xff]
        %v385 = vld [vmem:[%s3 + $0x10] sm:$0xff]
        %v386 = vld [vmem:[%s3 + $0x18] sm:$0xff]
        %v387 = vld [vmem:[%s3 + $0x20] sm:$0xff]
        %v388 = vld [vmem:[%s3 + $0x28] sm:$0xff]
        %v389 = vld [vmem:[%s3 + $0x30] sm:$0xff]
        %v390 = vld [vmem:[%s3 + $0x38] sm:$0xff]
        %v391 = vld [vmem:[%s3 + $0x40] sm:$0xff]
        %v392 = vld [vmem:[%s3 + $0x48] sm:$0xff]
        %v393 = vld [vmem:[%s3 + $0x50] sm:$0xff]
        %v394 = vld [vmem:[%s3 + $0x58] sm:$0xff]
        %v395 = vld [vmem:[%s3 + $0x60] sm:$0xff]
        %v396 = vld [vmem:[%s3 + $0x68] sm:$0xff]
        %v397 = vld [vmem:[%s3 + $0x70] sm:$0xff]
        %v398 = vld [vmem:[%s3 + $0x78] sm:$0xff]
        %v399 = vld [vmem:[%s4] sm:$0x1]
        %v401 = vlaneseq
        %v402 = vshrl.u32 %v401, 7
        %v403 = vsub.s32 0, %v402
        %v404 = vrot.slane %v399, %v403
        %406 = vmatprep.subr.mxu0 0.0
        %407 = vmatpush1.msra.mxu0 %v383
        %408 = vmatprep.subr.mxu0 0.0
        %409 = vmatpush1.msra.mxu0 %v384
        %410 = vmatprep.subr.mxu0 0.0
        %411 = vmatpush1.msra.mxu0 %v385
        %412 = vmatprep.subr.mxu0 0.0
        %413 = vmatpush1.msra.mxu0 %v386
        %414 = vmatprep.subr.mxu0 0.0
        %415 = vmatpush1.msra.mxu0 %v387
        %416 = vmatprep.subr.mxu0 0.0
        %417 = vmatpush1.msra.mxu0 %v388
        %418 = vmatprep.subr.mxu0 0.0
        %419 = vmatpush1.msra.mxu0 %v389
        %420 = vmatprep.subr.mxu0 0.0
        %421 = vmatpush1.msra.mxu0 %v390
        %422 = vmatprep.subr.mxu0 0.0
        %423 = vmatpush1.msra.mxu0 %v391
        %424 = vmatprep.subr.mxu0 0.0
        %425 = vmatpush1.msra.mxu0 %v392
        %426 = vmatprep.subr.mxu0 0.0
        %427 = vmatpush1.msra.mxu0 %v393
        %428 = vmatprep.subr.mxu0 0.0
        %429 = vmatpush1.msra.mxu0 %v394
        %430 = vmatprep.subr.mxu0 0.0
        %431 = vmatpush1.msra.mxu0 %v395
        %432 = vmatprep.subr.mxu0 0.0
        %433 = vmatpush1.msra.mxu0 %v396
        %434 = vmatprep.subr.mxu0 0.0
        %435 = vmatpush1.msra.mxu0 %v397
        %436 = vmatprep.subr.mxu0 0.0
        %437 = vmatpush1.msra.mxu0 %v398
        %438 = vmatprep.subr.mxu0 0.0
        %439 = vmatpush1.msra.mxu0 0.0
        %440 = vmatprep.subr.mxu0 0.0
        %441 = vmatpush1.msra.mxu0 0.0
        %442 = vmatprep.subr.mxu0 0.0
        %443 = vmatpush1.msra.mxu0 0.0
        %444 = vmatprep.subr.mxu0 0.0
        %445 = vmatpush1.msra.mxu0 0.0
        %446 = vmatprep.subr.mxu0 0.0
        %447 = vmatpush1.msra.mxu0 0.0
        %448 = vmatprep.subr.mxu0 0.0
        %449 = vmatpush1.msra.mxu0 0.0
        %450 = vmatprep.subr.mxu0 0.0
        %451 = vmatpush1.msra.mxu0 0.0
        %452 = vmatprep.subr.mxu0 0.0
        %453 = vmatpush1.msra.mxu0 0.0
        %454 = vmatprep.subr.mxu0 0.0
        %455 = vmatpush1.msra.mxu0 0.0
        %456 = vmatprep.subr.mxu0 0.0
        %457 = vmatpush1.msra.mxu0 0.0
        %458 = vmatprep.subr.mxu0 0.0
        %459 = vmatpush1.msra.mxu0 0.0
        %460 = vmatprep.subr.mxu0 0.0
        %461 = vmatpush1.msra.mxu0 0.0
        %462 = vmatprep.subr.mxu0 0.0
        %463 = vmatpush1.msra.mxu0 0.0
        %464 = vmatprep.subr.mxu0 0.0
        %465 = vmatpush1.msra.mxu0 0.0
        %466 = vmatprep.subr.mxu0 0.0
        %467 = vmatpush1.msra.mxu0 0.0
        %468 = vmatprep.subr.mxu0 0.0
        %469 = vmatpush1.msra.mxu0 0.0
        %470 = vmatprep.mubr.f32.mxu0 0.0
        %471 = vmatmul.mubr.f32.gmra.mrb[0].mxu0 %v381
        %v472 = vpop.f32.mrb[0].mxu0
        %v473 = vadd.f32 %v404, %v472
        %v474 = vpop.f32.mrb[0].mxu0
        %475 = vmatprep.mubr.f32.mxu0 0.0
        %476 = vmatmul.mubr.f32.gmra.mrb[0].mxu0 %v382
        %v477 = vpop.f32.mrb[0].mxu0
        %v478 = vadd.f32 %v404, %v477
        %v479 = vpop.f32.mrb[0].mxu0
        %480 = vdwg.mxu0
        %s481 = smul.u32 %s24, 16
        %v482 = vlaneseq
        %v483 = vshrl.u32 %v482, 7
        %v484 = vadd.s32 %v483, 8
        %v485 = vstv %s481
        %v486 = vadd.s32 %v485, %v483
        %v487 = vadd.s32 %v485, %v484
        %vm488 = vcmp.lt.s32.totalorder %v486, 45
        %vm489 = vcmp.lt.s32.totalorder %v487, 45
        %v490 = vsel %vm488, %v473, -1e+30
        %v491 = vsel %vm489, %v478, -1e+30
        %v492 = vld [vmem:[#allocation2] sm:$0x1]
        %vm493 = vcmask 130048
        %v494 = vsel %vm493, %v490, -inf
        %v495 = vsel %vm493, %v491, -inf
        %v496 = vmax.f32 %v494, %v495
        %v497 = vrot.slane %v496, 4
        %v498 = vmax.f32 %v496, %v497
        %v499 = vrot.slane %v498, 2
        %v500 = vmax.f32 %v498, %v499
        %v501 = vrot.slane %v500, 1
        %v502 = vmax.f32 %v500, %v501
        %v503 = vmax.f32 %v492, %v502
        %v504 = vsub.f32 %v492, %v503
        %v505 = vmul.f32 %v504, 1.442695
        %v506 = vpow.pop %v505
        %v508 = vlaneseq
        %v509 = vshrl.u32 %v508, 7
        %v510 = vsub.s32 0, %v509
        %v511 = vrot.slane %v503, %v510
        %v513 = vsub.f32 %v490, %v511
        %v514 = vsub.f32 %v491, %v511
        %v515 = vmul.f32 %v513, 1.442695
        %v516 = vpow.pop %v515
        %v517 = vmul.f32 %v514, 1.442695
        %v518 = vpow.pop %v517
        %v519 = vld [vmem:[#allocation3] sm:$0x1]
        %v520 = vmul.f32 %v506, %v519
        %v521 = vsel %vm493, %v516, 0.0
        %v522 = vsel %vm493, %v518, 0.0
        %v523 = vadd.f32 %v521, %v522
        %v524 = vrot.slane %v523, 4
        %v525 = vadd.f32 %v523, %v524
        %v526 = vrot.slane %v525, 2
        %v527 = vadd.f32 %v525, %v526
        %v528 = vrot.slane %v527, 1
        %v529 = vadd.f32 %v527, %v528
        %v530 = vadd.f32 %v520, %v529
        %vm531 = vcmask 122880
        %532 = vst.msk [vmem:[#allocation3] sm:$0x1] %vm531, %v530
        %533 = vxpose.xlu0.b32.start [1/16] %v516, 128
        %534 = vxpose.xlu0.b32.cont [2/16] %v518, 128
        %535 = vxpose.xlu0.b32.cont [3/16] 0.0, 128
        %536 = vxpose.xlu0.b32.cont [4/16] 0.0, 128
        %537 = vxpose.xlu0.b32.cont [5/16] 0.0, 128
        %538 = vxpose.xlu0.b32.cont [6/16] 0.0, 128
        %539 = vxpose.xlu0.b32.cont [7/16] 0.0, 128
        %540 = vxpose.xlu0.b32.cont [8/16] 0.0, 128
        %541 = vxpose.xlu0.b32.cont [9/16] 0.0, 128
        %542 = vxpose.xlu0.b32.cont [10/16] 0.0, 128
        %543 = vxpose.xlu0.b32.cont [11/16] 0.0, 128
        %544 = vxpose.xlu0.b32.cont [12/16] 0.0, 128
        %545 = vxpose.xlu0.b32.cont [13/16] 0.0, 128
        %546 = vxpose.xlu0.b32.cont [14/16] 0.0, 128
        %547 = vxpose.xlu0.b32.cont [15/16] 0.0, 128
        %548 = vxpose.xlu0.b32.end [16/16] 0.0, 128
        %v549 = vpop.trf.xlu0
        %v550 = vpop.trf.xlu0
        %v551 = vpop.trf.xlu0
        %v552 = vpop.trf.xlu0
        %v553 = vpop.trf.xlu0
        %v554 = vpop.trf.xlu0
        %v555 = vpop.trf.xlu0
        %v556 = vpop.trf.xlu0
        %v557 = vpop.trf.xlu0
        %v558 = vpop.trf.xlu0
        %v559 = vpop.trf.xlu0
        %v560 = vpop.trf.xlu0
        %v561 = vpop.trf.xlu0
        %v562 = vpop.trf.xlu0
        %v563 = vpop.trf.xlu0
        %v564 = vpop.trf.xlu0
        %v566 = vsel %vm493, %v549, 0
        %v569 = vsel %vm493, %v550, 0
        %571 = vmatprep.subr.mxu0 0.0
        %572 = vmatpush1.msra.mxu0 %v261
        %573 = vmatprep.subr.mxu0 0.0
        %574 = vmatpush1.msra.mxu0 %v262
        %575 = vmatprep.subr.mxu0 0.0
        %576 = vmatpush1.msra.mxu0 0.0
        %577 = vmatprep.subr.mxu0 0.0
        %578 = vmatpush1.msra.mxu0 0.0
        %579 = vmatprep.subr.mxu0 0.0
        %580 = vmatpush1.msra.mxu0 0.0
        %581 = vmatprep.subr.mxu0 0.0
        %582 = vmatpush1.msra.mxu0 0.0
        %583 = vmatprep.subr.mxu0 0.0
        %584 = vmatpush1.msra.mxu0 0.0
        %585 = vmatprep.subr.mxu0 0.0
        %586 = vmatpush1.msra.mxu0 0.0
        %587 = vmatprep.subr.mxu0 0.0
        %588 = vmatpush1.msra.mxu0 0.0
        %589 = vmatprep.subr.mxu0 0.0
        %590 = vmatpush1.msra.mxu0 0.0
        %591 = vmatprep.subr.mxu0 0.0
        %592 = vmatpush1.msra.mxu0 0.0
        %593 = vmatprep.subr.mxu0 0.0
        %594 = vmatpush1.msra.mxu0 0.0
        %595 = vmatprep.subr.mxu0 0.0
        %596 = vmatpush1.msra.mxu0 0.0
        %597 = vmatprep.subr.mxu0 0.0
        %598 = vmatpush1.msra.mxu0 0.0
        %599 = vmatprep.subr.mxu0 0.0
        %600 = vmatpush1.msra.mxu0 0.0
        %601 = vmatprep.subr.mxu0 0.0
        %602 = vmatpush1.msra.mxu0 0.0
        %603 = vmatprep.subr.mxu0 0.0
        %604 = vmatpush1.msra.mxu0 0.0
        %605 = vmatprep.subr.mxu0 0.0
        %606 = vmatpush1.msra.mxu0 0.0
        %607 = vmatprep.subr.mxu0 0.0
        %608 = vmatpush1.msra.mxu0 0.0
        %609 = vmatprep.subr.mxu0 0.0
        %610 = vmatpush1.msra.mxu0 0.0
        %611 = vmatprep.subr.mxu0 0.0
        %612 = vmatpush1.msra.mxu0 0.0
        %613 = vmatprep.subr.mxu0 0.0
        %614 = vmatpush1.msra.mxu0 0.0
        %615 = vmatprep.subr.mxu0 0.0
        %616 = vmatpush1.msra.mxu0 0.0
        %617 = vmatprep.subr.mxu0 0.0
        %618 = vmatpush1.msra.mxu0 0.0
        %619 = vmatprep.subr.mxu0 0.0
        %620 = vmatpush1.msra.mxu0 0.0
        %621 = vmatprep.subr.mxu0 0.0
        %622 = vmatpush1.msra.mxu0 0.0
        %623 = vmatprep.subr.mxu0 0.0
        %624 = vmatpush1.msra.mxu0 0.0
        %625 = vmatprep.subr.mxu0 0.0
        %626 = vmatpush1.msra.mxu0 0.0
        %627 = vmatprep.subr.mxu0 0.0
        %628 = vmatpush1.msra.mxu0 0.0
        %629 = vmatprep.subr.mxu0 0.0
        %630 = vmatpush1.msra.mxu0 0.0
        %631 = vmatprep.subr.mxu0 0.0
        %632 = vmatpush1.msra.mxu0 0.0
        %633 = vmatprep.subr.mxu0 0.0
        %634 = vmatpush1.msra.mxu0 0.0
        %635 = vmatprep.mubr.f32.mxu0 0.0
        %636 = vmatmul.mubr.f32.gmra.mrb[0].mxu0 %v566
        %v637 = vpop.f32.mrb[0].mxu0
        %v638 = vadd.f32 0.0, %v637
        %v639 = vpop.f32.mrb[0].mxu0
        %640 = vmatprep.mubr.f32.mxu0 0.0
        %641 = vmatmul.mubr.f32.gmra.mrb[0].mxu0 %v569
        %v642 = vpop.f32.mrb[0].mxu0
        %v643 = vadd.f32 0.0, %v642
        %v644 = vpop.f32.mrb[0].mxu0
        %645 = vdwg.mxu0
        %646 = vxpose.xlu0.b32.start [1/16] %v506, 128
        %647 = vxpose.xlu0.b32.cont [2/16] 0.0, 128
        %648 = vxpose.xlu0.b32.cont [3/16] 0.0, 128
        %649 = vxpose.xlu0.b32.cont [4/16] 0.0, 128
        %650 = vxpose.xlu0.b32.cont [5/16] 0.0, 128
        %651 = vxpose.xlu0.b32.cont [6/16] 0.0, 128
        %652 = vxpose.xlu0.b32.cont [7/16] 0.0, 128
        %653 = vxpose.xlu0.b32.cont [8/16] 0.0, 128
        %654 = vxpose.xlu0.b32.cont [9/16] 0.0, 128
        %655 = vxpose.xlu0.b32.cont [10/16] 0.0, 128
        %656 = vxpose.xlu0.b32.cont [11/16] 0.0, 128
        %657 = vxpose.xlu0.b32.cont [12/16] 0.0, 128
        %658 = vxpose.xlu0.b32.cont [13/16] 0.0, 128
        %659 = vxpose.xlu0.b32.cont [14/16] 0.0, 128
        %660 = vxpose.xlu0.b32.cont [15/16] 0.0, 128
        %661 = vxpose.xlu0.b32.end [16/16] 0.0, 128
        %v662 = vpop.trf.xlu0
        %v663 = vpop.trf.xlu0
        %v664 = vpop.trf.xlu0
        %v665 = vpop.trf.xlu0
        %v666 = vpop.trf.xlu0
        %v667 = vpop.trf.xlu0
        %v668 = vpop.trf.xlu0
        %v669 = vpop.trf.xlu0
        %v670 = vpop.trf.xlu0
        %v671 = vpop.trf.xlu0
        %v672 = vpop.trf.xlu0
        %v673 = vpop.trf.xlu0
        %v674 = vpop.trf.xlu0
        %v675 = vpop.trf.xlu0
        %v676 = vpop.trf.xlu0
        %v677 = vpop.trf.xlu0
        %v678 = vld [vmem:[#allocation4] sm:$0xff]
        %v679 = vld [vmem:[#allocation4 + $0x8] sm:$0xff]
        %681 = vset.pattern.permute.xlu0 0
        %682 = vperm.xlu0 %681, %v662
        %v683 = vpop.permute.xlu0 %682
        %686 = vset.pattern.permute.xlu0 0
        %687 = vperm.xlu0 %686, %v663
        %v688 = vpop.permute.xlu0 %687
        %v690 = vmul.f32 %v683, %v678
        %v691 = vmul.f32 %v688, %v679
        %v692 = vadd.f32 %v690, %v638
        %v693 = vadd.f32 %v691, %v643
        %694 = vst.msk [vmem:[#allocation4] sm:$0xff] %vm283, %v692
        %695 = vst.msk [vmem:[#allocation4 + $0x8] sm:$0xff] %vm283, %v693
        %696 = vst.msk [vmem:[#allocation2] sm:$0x1] %vm531, %v503
        %p697 = scmp.eq.s32.totalorder %s24, 2
        // Predicated region
        $region45: #{tpu_custom_call.1} parent=39 // pred_check
          %p698 = pneg %p697
        $region46: #{tpu_custom_call.1} parent=39 // pred_check_branch
          %700 = sbr.rel (%p698) target = $region48
        $region47: #{tpu_custom_call.1} parent=39 // pred_region
          %v701 = vld [vmem:[#allocation3] sm:$0x1]
          %v702 = vrcp.pop %v701
          %v703 = vmul.f32 1.0, %v702
          %v704 = vld [vmem:[#allocation4] sm:$0xff]
          %v705 = vld [vmem:[#allocation4 + $0x8] sm:$0xff]
          %706 = vxpose.xlu0.b32.start [1/16] %v703, 128
          %707 = vxpose.xlu0.b32.cont [2/16] 0.0, 128
          %708 = vxpose.xlu0.b32.cont [3/16] 0.0, 128
          %709 = vxpose.xlu0.b32.cont [4/16] 0.0, 128
          %710 = vxpose.xlu0.b32.cont [5/16] 0.0, 128
          %711 = vxpose.xlu0.b32.cont [6/16] 0.0, 128
          %712 = vxpose.xlu0.b32.cont [7/16] 0.0, 128
          %713 = vxpose.xlu0.b32.cont [8/16] 0.0, 128
          %714 = vxpose.xlu0.b32.cont [9/16] 0.0, 128
          %715 = vxpose.xlu0.b32.cont [10/16] 0.0, 128
          %716 = vxpose.xlu0.b32.cont [11/16] 0.0, 128
          %717 = vxpose.xlu0.b32.cont [12/16] 0.0, 128
          %718 = vxpose.xlu0.b32.cont [13/16] 0.0, 128
          %719 = vxpose.xlu0.b32.cont [14/16] 0.0, 128
          %720 = vxpose.xlu0.b32.cont [15/16] 0.0, 128
          %721 = vxpose.xlu0.b32.end [16/16] 0.0, 128
          %v722 = vpop.trf.xlu0
          %v723 = vpop.trf.xlu0
          %v724 = vpop.trf.xlu0
          %v725 = vpop.trf.xlu0
          %v726 = vpop.trf.xlu0
          %v727 = vpop.trf.xlu0
          %v728 = vpop.trf.xlu0
          %v729 = vpop.trf.xlu0
          %v730 = vpop.trf.xlu0
          %v731 = vpop.trf.xlu0
          %v732 = vpop.trf.xlu0
          %v733 = vpop.trf.xlu0
          %v734 = vpop.trf.xlu0
          %v735 = vpop.trf.xlu0
          %v736 = vpop.trf.xlu0
          %v737 = vpop.trf.xlu0
          %739 = vset.pattern.permute.xlu0 0
          %740 = vperm.xlu0 %739, %v722
          %v741 = vpop.permute.xlu0 %740
          %744 = vset.pattern.permute.xlu0 0
          %745 = vperm.xlu0 %744, %v723
          %v746 = vpop.permute.xlu0 %745
          %v748 = vmul.f32 %v704, %v741
          %v749 = vmul.f32 %v705, %v746
          %750 = vst.msk [vmem:[%s240] sm:$0xff] %vm283, %v748
          %751 = vst.msk [vmem:[%s240 + $0x8] sm:$0xff] %vm283, %v749
        $region48: #{tpu_custom_call.1} parent=39 // pred_fallthru
          _
        %s752 = sand.u32 %s151, 1
        %s753 = scalar_lea.sflag [#allocation6], %s752
        %s754 = sand.u32 %s151, 1
        %s755 = smul.addr %s754, 16
        %s756 = scalar_lea.vmem [#allocation5], %s755
        // Predicated region
        $region49: #{tpu_custom_call.1} parent=39 // pred_check
          %p757 = pneg %p161
        $region50: #{tpu_custom_call.1} parent=39 // pred_check_branch
          %759 = sbr.rel (%p757) target = $region52
        $region51: #{tpu_custom_call.1} parent=39 // pred_region
          %s761 = ssub.s32 256, 256
          %762 = vsyncadd %s753, %s761
          %s763 = smul.addr %s23, 2
          %s764 = smul.addr %s763, 128
          %s765 = scalar_lea.hbm %s5, %s764
          %s766 = sshll.u32 %s756, 4
          %s767 = int_to_ptr.vmem [resolvable:$true] %s766
          %772 = dma.vmem_to_hbm [thread:$0]  %s767, 256, %s765, %s753, 128, 128, 8
        $region52: #{tpu_custom_call.1} parent=39 // pred_fallthru
          _
      $region40: #{tpu_custom_call.1} parent=5 // pred_fallthru
        _
      %p773 = scmp.le.s32.totalorder 2, %s14
      // Predicated region
      $region53: #{tpu_custom_call.1} parent=5 // pred_check
        %p774 = pneg %p773
      $region54: #{tpu_custom_call.1} parent=5 // pred_check_branch
        %776 = sbr.rel (%p774) target = $region56
      $region55: #{tpu_custom_call.1} parent=5 // pred_region
        %s777 = ssub.s32 %s14, 2
        // Predicated region
        $region57: #{tpu_custom_call.1} parent=55 // pred_check
          %p778 = pneg %p167
        $region58: #{tpu_custom_call.1} parent=55 // pred_check_branch
          %780 = sbr.rel (%p778) target = $region60
        $region59: #{tpu_custom_call.1} parent=55 // pred_region
          %s781 = sand.u32 %s152, 1
          %s782 = scalar_lea.sflag [#allocation6], %s781
          %s783 = sand.u32 %s152, 1
          %s784 = smul.addr %s783, 16
          %s785 = scalar_lea.vmem [#allocation5], %s784
          %786 = dma.done %s782, 256
        $region60: #{tpu_custom_call.1} parent=55 // pred_fallthru
          _
      $region56: #{tpu_custom_call.1} parent=5 // pred_fallthru
        _
    $region6: #{tpu_custom_call.1} parent=1 // loop_footer
      %s18 = sadd.s32 1, %s14
    $region7: #{tpu_custom_call.1} parent=1 // loop_footer_branch
      %13 = sbr.rel target = $region3
    $region8: #{tpu_custom_call.1} parent=1 // loop_exit
      _
    %787 = vsyncpa [#allocation6], 1
    %s788 = scalar_lea.sflag [#allocation6], 1
    %789 = vsyncpa %s788, 1

</llo_original>
